<compile_context>
chip_gen: v7x
topology: tpu7x:2x2x1
jax: 0.10.0
libtpu: 0.0.40
codegen_flags: <defaults>
</compile_context>

<pallas_src>
import functools

import jax
import jax.numpy as jnp
from jax.experimental import pallas as pl
from jax.experimental.pallas import tpu as pltpu

HIGHEST = jax.lax.Precision.HIGHEST


# ---------------------------------------------------------------------------
# Pallas kernel
# ---------------------------------------------------------------------------

def _ds_block(x, dw, pw, pb, mL, mR, mT, mB, *, W, HW):
  """DSConv (depthwise 3x3 + pointwise 1x1) + folded BN + ReLU, (C, H*W) layout.

  x:  (Cin, HW) f32 activation.
  dw: (Cin, 9)  depthwise taps, row-major over (dy, dx) in {-1,0,1}.
  pw: (Cout, Cin) pointwise weights with BN scale folded in.
  pb: (Cout, 1)   bias with depthwise bias + pointwise bias + BN folded in.
  mL/mR/mT/mB: (1, HW) zero-padding border masks (left/right col, top/bot row).
  """
  # Column-resolved taps: only two +/-1 lane rolls (XLU), masked on the VPU.
  xl = pltpu.roll(x, shift=1, axis=1) * mL        # x[h, w-1]
  xr = pltpu.roll(x, shift=HW - 1, axis=1) * mR   # x[h, w+1]
  # Per-conv-row weighted sums (VPU FMAs), then a single +/-W roll per
  # off-centre row -> 4 rolls/block total instead of 8.
  s_top = xl * dw[:, 0:1] + x * dw[:, 1:2] + xr * dw[:, 2:3]
  s_mid = xl * dw[:, 3:4] + x * dw[:, 4:5] + xr * dw[:, 5:6]
  s_bot = xl * dw[:, 6:7] + x * dw[:, 7:8] + xr * dw[:, 8:9]
  acc = (s_mid
         + pltpu.roll(s_top, shift=W, axis=1) * mT
         + pltpu.roll(s_bot, shift=HW - W, axis=1) * mB)
  # Pointwise 1x1 as (Cout, Cin) @ (Cin, HW): lane-dense N on the MXU.
  # TODO(synk): at Cout/Cin >= 128 cast operands to bf16 (f32 accumulation).
  y = jnp.dot(pw, acc, preferred_element_type=jnp.float32) + pb
  return jnp.maximum(y, 0.0)   # BN already folded into pw/pb


def fused_segnet_up_kernel(x1_ref, up_ref, *rest, H, W, use_conv2):
  o_ref = rest[-1]
  p_refs = rest[:-1]                       # 9 refs: (dw, pw, pb) per block
  blocks = [tuple(r[...] for r in p_refs[3 * i:3 * i + 3]) for i in range(3)]
  HW = H * W

  # In-kernel zero-padding border masks (replaces the old (9, HW) operand).
  lane = jax.lax.broadcasted_iota(jnp.int32, (1, HW), 1)
  col = lane % W
  f32 = jnp.float32
  mL = (col != 0).astype(f32)
  mR = (col != W - 1).astype(f32)
  mT = (lane >= W).astype(f32)
  mB = (lane < (H - 1) * W).astype(f32)

  # skip-add; `up` was produced by the separable bilinear upsample.
  x = x1_ref[...] + up_ref[...]

  x = _ds_block(x, *blocks[0], mL, mR, mT, mB, W=W, HW=HW)
  if use_conv2:
    x = _ds_block(x, *blocks[1], mL, mR, mT, mB, W=W, HW=HW)
  x = _ds_block(x, *blocks[2], mL, mR, mT, mB, W=W, HW=HW)
  # TODO(synk): pad Cout to a multiple of 8 (and consider bf16 output) to keep
  # stores unmasked when out_channel is small.
  o_ref[...] = x.astype(o_ref.dtype)


# ---------------------------------------------------------------------------
# Wrapper
# ---------------------------------------------------------------------------

def _upsample_matrix(n_in, n_out):
  """Bilinear interpolation matrix, align_corners=True (UpsamplingBilinear2d)."""
  if n_in == 1:
    return jnp.ones((n_out, 1), jnp.float32)
  i = jnp.arange(n_out, dtype=jnp.float32)
  src = i * (n_in - 1) / (n_out - 1)
  lo = jnp.clip(jnp.floor(src).astype(jnp.int32), 0, n_in - 2)
  frac = src - lo.astype(jnp.float32)
  m = jnp.zeros((n_out, n_in), jnp.float32)
  m = m.at[jnp.arange(n_out), lo].add(1.0 - frac)
  m = m.at[jnp.arange(n_out), lo + 1].add(frac)
  return m


def _fold_block(block_params):
  """Fold depthwise bias, pointwise bias and inference-BN into (dw, pw, pb)."""
  dw, dwb, pwt, pwb, scale, shift = block_params
  pw_f = pwt * scale                                      # (Cout, Cin)
  pb_f = scale * (jnp.dot(pwt, dwb) + pwb) + shift        # (Cout, 1)
  return dw, pw_f, pb_f


def segnet_up_forward(inputs1_nchw, inputs2_nchw, params, scales):
  """segnetUp.forward: inputs1 + up(inputs2) -> conv1 -> [conv2] -> conv3."""
  N, cin, H, W = inputs1_nchw.shape
  _, _, h2, w2 = inputs2_nchw.shape
  assert H == 2 * h2 and W == 2 * w2
  HW = H * W
  cout = params['conv3'][2].shape[0]
  use_conv2 = scales <= 2

  # Separable bilinear x2 upsample (align_corners=True) on the low-res input,
  # done by XLA: constants are O(H*h2 + W*w2), no O(HW^2) kron matrix.
  mh = _upsample_matrix(h2, H)                          # (H, h2)
  mw = _upsample_matrix(w2, W)                          # (W, w2)
  up = jnp.einsum('hk,nckw->nchw', mh, inputs2_nchw, precision=HIGHEST)
  up = jnp.einsum('wk,nchk->nchw', mw, up, precision=HIGHEST)

  # NCHW -> (N, C, H*W): pure reshapes, lane-dense spatial axis.
  x1 = inputs1_nchw.reshape(N, cin, HW)
  upf = up.reshape(N, cin, HW)

  flat_params = []
  for name in ('conv1', 'conv2', 'conv3'):
    flat_params.extend(_fold_block(params[name]))       # 9 small operands

  in_specs = [
      pl.BlockSpec((None, cin, HW), lambda n: (n, 0, 0)),   # inputs1
      pl.BlockSpec((None, cin, HW), lambda n: (n, 0, 0)),   # upsampled inputs2
  ] + [pl.BlockSpec(p.shape, lambda n: (0, 0)) for p in flat_params]

  kern = functools.partial(fused_segnet_up_kernel, H=H, W=W,
                           use_conv2=use_conv2)
  out = pl.pallas_call(
      kern,
      out_shape=jax.ShapeDtypeStruct((N, cout, HW), jnp.float32),
      grid=(N,),
      in_specs=in_specs,
      out_specs=pl.BlockSpec((None, cout, HW), lambda n: (n, 0, 0)),
      compiler_params=pltpu.CompilerParams(
          dimension_semantics=("parallel",)),
  )(x1, upf, *flat_params)
  return out.reshape(N, cout, H, W)


# ---------------------------------------------------------------------------
# Deterministic parameter construction (kernel-native layout)
# ---------------------------------------------------------------------------

def make_block_params(key, cin, cout):
  ks = jax.random.split(key, 6)
  dw = 0.1 * jax.random.normal(ks[0], (cin, 9), jnp.float32)    # (C, 3*3)
  dwb = 0.1 * jax.random.normal(ks[1], (cin, 1), jnp.float32)
  pwt = 0.1 * jax.random.normal(ks[2], (cout, cin), jnp.float32)
  pwb = 0.1 * jax.random.normal(ks[3], (cout, 1), jnp.float32)
  gamma = 1.0 + 0.1 * jax.random.normal(ks[4], (cout, 1), jnp.float32)
  beta = 0.1 * jax.random.normal(ks[5], (cout, 1), jnp.float32)
  mean = jnp.zeros((cout, 1), jnp.float32)
  var = jnp.ones((cout, 1), jnp.float32)
  scale = gamma / jnp.sqrt(var + 1e-5)
  shift = beta - mean * scale
  return (dw, dwb, pwt, pwb, scale, shift)


# ---------------------------------------------------------------------------
# Pure-JAX reference (for correctness check)
# ---------------------------------------------------------------------------

def ref_dsconv(x_nchw, params):
  dw, dwb, pwt, pwb, sc, sh = params
  cin = x_nchw.shape[1]
  w = jnp.transpose(dw.reshape(cin, 3, 3), (1, 2, 0))[:, :, None, :]  # HWIO
  y = jax.lax.conv_general_dilated(
      x_nchw, w, (1, 1), 'SAME',
      dimension_numbers=('NCHW', 'HWIO', 'NCHW'),
      feature_group_count=cin, precision=HIGHEST)
  y = y + dwb.reshape(1, cin, 1, 1)
  y = jnp.einsum('nchw,oc->nohw', y, pwt, precision=HIGHEST)
  y = y + pwb.reshape(1, -1, 1, 1)
  y = y * sc.reshape(1, -1, 1, 1) + sh.reshape(1, -1, 1, 1)
  return jnp.maximum(y, 0.0)


def ref_forward(inputs1_nchw, inputs2_nchw, params, scales):
  _, _, h2, w2 = inputs2_nchw.shape
  mh = _upsample_matrix(h2, 2 * h2)
  mw = _upsample_matrix(w2, 2 * w2)
  up = jnp.einsum('ph,nchw->ncpw', mh, inputs2_nchw, precision=HIGHEST)
  up = jnp.einsum('qw,ncpw->ncpq', mw, up, precision=HIGHEST)
  out = ref_dsconv(inputs1_nchw + up, params['conv1'])
  if scales <= 2:
    out = ref_dsconv(out, params['conv2'])
  out = ref_dsconv(out, params['conv3'])
  return out


# ---------------------------------------------------------------------------

if __name__ == "__main__":
  N, IN_CH, OUT_CH = 2, 8, 4
  H, W = 16, 16          # inputs1 spatial size
  SCALES = 2             # scales <= 2 -> conv2 branch is taken

  root = jax.random.PRNGKey(0)
  k1, k2, kp1, kp2, kp3 = jax.random.split(root, 5)

  inputs1 = jax.random.normal(k1, (N, IN_CH, H, W), jnp.float32)        # NCHW
  inputs2 = jax.random.normal(k2, (N, IN_CH, H // 2, W // 2), jnp.float32)

  params = {
      'conv1': make_block_params(kp1, IN_CH, IN_CH),
      'conv2': make_block_params(kp2, IN_CH, IN_CH),
      'conv3': make_block_params(kp3, IN_CH, OUT_CH),
  }

  out = jax.block_until_ready(
      segnet_up_forward(inputs1, inputs2, params, SCALES))
  ref = jax.block_until_ready(ref_forward(inputs1, inputs2, params, SCALES))

  assert out.shape == (N, OUT_CH, H, W), out.shape
  err = float(jnp.max(jnp.abs(out - ref)))
  assert jnp.allclose(out, ref, atol=1e-3, rtol=1e-3), err

  print("KERNEL_OK")
</pallas_src>

<mosaic_0001>
module attributes {stable_mosaic.version = 11 : i64} {
  func.func @fused_segnet_up_kernel(%arg0: i32, %arg1: memref<1x8x256xf32, #tpu.memory_space<vmem>>, %arg2: memref<1x8x256xf32, #tpu.memory_space<vmem>>, %arg3: memref<8x9xf32, #tpu.memory_space<vmem>>, %arg4: memref<8x8xf32, #tpu.memory_space<vmem>>, %arg5: memref<8x1xf32, #tpu.memory_space<vmem>>, %arg6: memref<8x9xf32, #tpu.memory_space<vmem>>, %arg7: memref<8x8xf32, #tpu.memory_space<vmem>>, %arg8: memref<8x1xf32, #tpu.memory_space<vmem>>, %arg9: memref<8x9xf32, #tpu.memory_space<vmem>>, %arg10: memref<4x8xf32, #tpu.memory_space<vmem>>, %arg11: memref<4x1xf32, #tpu.memory_space<vmem>>, %arg12: memref<1x4x256xf32, #tpu.memory_space<vmem>>) attributes {dimension_semantics = [#tpu.dimension_semantics<parallel>], iteration_bounds = array<i64: 2>, scalar_prefetch = 0 : i64, scratch_operands = 0 : i64, tpu.core_type = #tpu.core_type<tc>, window_params = [{transform_indices = @transform_0, window_bounds = array<i64: 1, 8, 256>}, {transform_indices = @transform_1, window_bounds = array<i64: 1, 8, 256>}, {pipeline_mode = #tpu.pipeline_mode<synchronous>, transform_indices = @transform_2, window_bounds = array<i64: 8, 9>}, {pipeline_mode = #tpu.pipeline_mode<synchronous>, transform_indices = @transform_3, window_bounds = array<i64: 8, 8>}, {pipeline_mode = #tpu.pipeline_mode<synchronous>, transform_indices = @transform_4, window_bounds = array<i64: 8, 1>}, {pipeline_mode = #tpu.pipeline_mode<synchronous>, transform_indices = @transform_5, window_bounds = array<i64: 8, 9>}, {pipeline_mode = #tpu.pipeline_mode<synchronous>, transform_indices = @transform_6, window_bounds = array<i64: 8, 8>}, {pipeline_mode = #tpu.pipeline_mode<synchronous>, transform_indices = @transform_7, window_bounds = array<i64: 8, 1>}, {pipeline_mode = #tpu.pipeline_mode<synchronous>, transform_indices = @transform_8, window_bounds = array<i64: 8, 9>}, {pipeline_mode = #tpu.pipeline_mode<synchronous>, transform_indices = @transform_9, window_bounds = array<i64: 4, 8>}, {pipeline_mode = #tpu.pipeline_mode<synchronous>, transform_indices = @transform_10, window_bounds = array<i64: 4, 1>}, {transform_indices = @transform_11, window_bounds = array<i64: 1, 4, 256>}]} {
    %c0 = arith.constant 0 : index
    %c0_0 = arith.constant 0 : index
    %0 = vector.load %arg3[%c0, %c0_0] : memref<8x9xf32, #tpu.memory_space<vmem>>, vector<8x9xf32>
    %c0_1 = arith.constant 0 : index
    %c0_2 = arith.constant 0 : index
    %1 = vector.load %arg4[%c0_1, %c0_2] : memref<8x8xf32, #tpu.memory_space<vmem>>, vector<8x8xf32>
    %c0_3 = arith.constant 0 : index
    %c0_4 = arith.constant 0 : index
    %2 = vector.load %arg5[%c0_3, %c0_4] : memref<8x1xf32, #tpu.memory_space<vmem>>, vector<8x1xf32>
    %c0_5 = arith.constant 0 : index
    %c0_6 = arith.constant 0 : index
    %3 = vector.load %arg6[%c0_5, %c0_6] : memref<8x9xf32, #tpu.memory_space<vmem>>, vector<8x9xf32>
    %c0_7 = arith.constant 0 : index
    %c0_8 = arith.constant 0 : index
    %4 = vector.load %arg7[%c0_7, %c0_8] : memref<8x8xf32, #tpu.memory_space<vmem>>, vector<8x8xf32>
    %c0_9 = arith.constant 0 : index
    %c0_10 = arith.constant 0 : index
    %5 = vector.load %arg8[%c0_9, %c0_10] : memref<8x1xf32, #tpu.memory_space<vmem>>, vector<8x1xf32>
    %c0_11 = arith.constant 0 : index
    %c0_12 = arith.constant 0 : index
    %6 = vector.load %arg9[%c0_11, %c0_12] : memref<8x9xf32, #tpu.memory_space<vmem>>, vector<8x9xf32>
    %c0_13 = arith.constant 0 : index
    %c0_14 = arith.constant 0 : index
    %7 = vector.load %arg10[%c0_13, %c0_14] : memref<4x8xf32, #tpu.memory_space<vmem>>, vector<4x8xf32>
    %c0_15 = arith.constant 0 : index
    %c0_16 = arith.constant 0 : index
    %8 = vector.load %arg11[%c0_15, %c0_16] : memref<4x1xf32, #tpu.memory_space<vmem>>, vector<4x1xf32>
    %9 = tpu.iota {dimensions = array<i32: 1>} : vector<1x256xi32>
    %c16_i32 = arith.constant 16 : i32
    %c0_i32 = arith.constant 0 : i32
    %10 = arith.cmpi eq, %c16_i32, %c0_i32 : i32
    %c1_i32 = arith.constant 1 : i32
    %11 = arith.select %10, %c1_i32, %c16_i32 : i32
    %12 = vector.broadcast %11 : i32 to vector<1x256xi32>
    %13 = arith.remsi %9, %12 : vector<1x256xi32>
    %c0_i32_17 = arith.constant 0 : i32
    %14 = vector.broadcast %c0_i32_17 : i32 to vector<1x256xi32>
    %15 = arith.cmpi ne, %13, %14 : vector<1x256xi32>
    %c0_i32_18 = arith.constant 0 : i32
    %16 = vector.broadcast %c0_i32_18 : i32 to vector<1x256xi32>
    %17 = arith.cmpi slt, %13, %16 : vector<1x256xi32>
    %c0_i32_19 = arith.constant 0 : i32
    %18 = arith.cmpi slt, %11, %c0_i32_19 : i32
    %19 = vector.broadcast %18 : i1 to vector<1x256xi1>
    %20 = vector.broadcast %19 : vector<1x256xi1> to vector<1x256xi1>
    %21 = arith.xori %17, %20 : vector<1x256xi1>
    %22 = arith.andi %21, %15 : vector<1x256xi1>
    %23 = vector.broadcast %11 : i32 to vector<1x256xi32>
    %24 = arith.addi %13, %23 : vector<1x256xi32>
    %25 = arith.select %22, %24, %13 : vector<1x256xi1>, vector<1x256xi32>
    %c0_i32_20 = arith.constant 0 : i32
    %26 = vector.broadcast %c0_i32_20 : i32 to vector<1x256xi32>
    %27 = arith.cmpi ne, %25, %26 : vector<1x256xi32>
    %28 = arith.extui %27 : vector<1x256xi1> to vector<1x256xi32>
    %29 = arith.sitofp %28 : vector<1x256xi32> to vector<1x256xf32>
    %c15_i32 = arith.constant 15 : i32
    %30 = vector.broadcast %c15_i32 : i32 to vector<1x256xi32>
    %31 = arith.cmpi ne, %25, %30 : vector<1x256xi32>
    %32 = arith.extui %31 : vector<1x256xi1> to vector<1x256xi32>
    %33 = arith.sitofp %32 : vector<1x256xi32> to vector<1x256xf32>
    %c16_i32_21 = arith.constant 16 : i32
    %34 = vector.broadcast %c16_i32_21 : i32 to vector<1x256xi32>
    %35 = arith.cmpi sge, %9, %34 : vector<1x256xi32>
    %36 = arith.extui %35 : vector<1x256xi1> to vector<1x256xi32>
    %37 = arith.sitofp %36 : vector<1x256xi32> to vector<1x256xf32>
    %c240_i32 = arith.constant 240 : i32
    %38 = vector.broadcast %c240_i32 : i32 to vector<1x256xi32>
    %39 = arith.cmpi slt, %9, %38 : vector<1x256xi32>
    %40 = arith.extui %39 : vector<1x256xi1> to vector<1x256xi32>
    %41 = arith.sitofp %40 : vector<1x256xi32> to vector<1x256xf32>
    %c0_22 = arith.constant 0 : index
    %c0_23 = arith.constant 0 : index
    %c0_24 = arith.constant 0 : index
    %42 = vector.load %arg1[%c0_22, %c0_23, %c0_24] : memref<1x8x256xf32, #tpu.memory_space<vmem>>, vector<1x8x256xf32>
    %43 = vector.shape_cast %42 : vector<1x8x256xf32> to vector<8x256xf32>
    %c0_25 = arith.constant 0 : index
    %c0_26 = arith.constant 0 : index
    %c0_27 = arith.constant 0 : index
    %44 = vector.load %arg2[%c0_25, %c0_26, %c0_27] : memref<1x8x256xf32, #tpu.memory_space<vmem>>, vector<1x8x256xf32>
    %45 = vector.shape_cast %44 : vector<1x8x256xf32> to vector<8x256xf32>
    %46 = arith.addf %43, %45 : vector<8x256xf32>
    %c1_i32_28 = arith.constant 1 : i32
    %47 = tpu.dynamic_rotate %46 by %c1_i32_28 dim 1 : vector<8x256xf32>, i32 -> vector<8x256xf32>
    %48 = vector.broadcast %29 : vector<1x256xf32> to vector<8x256xf32>
    %49 = arith.mulf %47, %48 : vector<8x256xf32>
    %c255_i32 = arith.constant 255 : i32
    %50 = tpu.dynamic_rotate %46 by %c255_i32 dim 1 : vector<8x256xf32>, i32 -> vector<8x256xf32>
    %51 = vector.broadcast %33 : vector<1x256xf32> to vector<8x256xf32>
    %52 = arith.mulf %50, %51 : vector<8x256xf32>
    %53 = vector.extract_strided_slice %0 {offsets = [0, 0], sizes = [8, 1], strides = [1, 1]} : vector<8x9xf32> to vector<8x1xf32>
    %54 = vector.broadcast %53 : vector<8x1xf32> to vector<8x256xf32>
    %55 = arith.mulf %49, %54 : vector<8x256xf32>
    %56 = vector.extract_strided_slice %0 {offsets = [0, 1], sizes = [8, 1], strides = [1, 1]} : vector<8x9xf32> to vector<8x1xf32>
    %57 = vector.broadcast %56 : vector<8x1xf32> to vector<8x256xf32>
    %58 = arith.mulf %46, %57 : vector<8x256xf32>
    %59 = arith.addf %55, %58 : vector<8x256xf32>
    %60 = vector.extract_strided_slice %0 {offsets = [0, 2], sizes = [8, 1], strides = [1, 1]} : vector<8x9xf32> to vector<8x1xf32>
    %61 = vector.broadcast %60 : vector<8x1xf32> to vector<8x256xf32>
    %62 = arith.mulf %52, %61 : vector<8x256xf32>
    %63 = arith.addf %59, %62 : vector<8x256xf32>
    %64 = vector.extract_strided_slice %0 {offsets = [0, 3], sizes = [8, 1], strides = [1, 1]} : vector<8x9xf32> to vector<8x1xf32>
    %65 = vector.broadcast %64 : vector<8x1xf32> to vector<8x256xf32>
    %66 = arith.mulf %49, %65 : vector<8x256xf32>
    %67 = vector.extract_strided_slice %0 {offsets = [0, 4], sizes = [8, 1], strides = [1, 1]} : vector<8x9xf32> to vector<8x1xf32>
    %68 = vector.broadcast %67 : vector<8x1xf32> to vector<8x256xf32>
    %69 = arith.mulf %46, %68 : vector<8x256xf32>
    %70 = arith.addf %66, %69 : vector<8x256xf32>
    %71 = vector.extract_strided_slice %0 {offsets = [0, 5], sizes = [8, 1], strides = [1, 1]} : vector<8x9xf32> to vector<8x1xf32>
    %72 = vector.broadcast %71 : vector<8x1xf32> to vector<8x256xf32>
    %73 = arith.mulf %52, %72 : vector<8x256xf32>
    %74 = arith.addf %70, %73 : vector<8x256xf32>
    %75 = vector.extract_strided_slice %0 {offsets = [0, 6], sizes = [8, 1], strides = [1, 1]} : vector<8x9xf32> to vector<8x1xf32>
    %76 = vector.broadcast %75 : vector<8x1xf32> to vector<8x256xf32>
    %77 = arith.mulf %49, %76 : vector<8x256xf32>
    %78 = vector.extract_strided_slice %0 {offsets = [0, 7], sizes = [8, 1], strides = [1, 1]} : vector<8x9xf32> to vector<8x1xf32>
    %79 = vector.broadcast %78 : vector<8x1xf32> to vector<8x256xf32>
    %80 = arith.mulf %46, %79 : vector<8x256xf32>
    %81 = arith.addf %77, %80 : vector<8x256xf32>
    %82 = vector.extract_strided_slice %0 {offsets = [0, 8], sizes = [8, 1], strides = [1, 1]} : vector<8x9xf32> to vector<8x1xf32>
    %83 = vector.broadcast %82 : vector<8x1xf32> to vector<8x256xf32>
    %84 = arith.mulf %52, %83 : vector<8x256xf32>
    %85 = arith.addf %81, %84 : vector<8x256xf32>
    %c16_i32_29 = arith.constant 16 : i32
    %86 = tpu.dynamic_rotate %63 by %c16_i32_29 dim 1 : vector<8x256xf32>, i32 -> vector<8x256xf32>
    %87 = vector.broadcast %37 : vector<1x256xf32> to vector<8x256xf32>
    %88 = arith.mulf %86, %87 : vector<8x256xf32>
    %89 = arith.addf %74, %88 : vector<8x256xf32>
    %c240_i32_30 = arith.constant 240 : i32
    %90 = tpu.dynamic_rotate %85 by %c240_i32_30 dim 1 : vector<8x256xf32>, i32 -> vector<8x256xf32>
    %91 = vector.broadcast %41 : vector<1x256xf32> to vector<8x256xf32>
    %92 = arith.mulf %90, %91 : vector<8x256xf32>
    %93 = arith.addf %89, %92 : vector<8x256xf32>
    %cst = arith.constant dense<0.000000e+00> : vector<8x256xf32>
    %94 = tpu.matmul %1, %93, %cst {dimension_numbers = #tpu.dot_dimension_numbers<[1], [0], [0], [1], [0, 0, 1, 1], [], []>} : vector<8x8xf32>, vector<8x256xf32>, vector<8x256xf32> -> vector<8x256xf32>
    %95 = vector.broadcast %2 : vector<8x1xf32> to vector<8x256xf32>
    %96 = arith.addf %94, %95 : vector<8x256xf32>
    %cst_31 = arith.constant 0.000000e+00 : f32
    %97 = vector.broadcast %cst_31 : f32 to vector<8x256xf32>
    %98 = arith.maximumf %96, %97 : vector<8x256xf32>
    %c1_i32_32 = arith.constant 1 : i32
    %99 = tpu.dynamic_rotate %98 by %c1_i32_32 dim 1 : vector<8x256xf32>, i32 -> vector<8x256xf32>
    %100 = vector.broadcast %29 : vector<1x256xf32> to vector<8x256xf32>
    %101 = arith.mulf %99, %100 : vector<8x256xf32>
    %c255_i32_33 = arith.constant 255 : i32
    %102 = tpu.dynamic_rotate %98 by %c255_i32_33 dim 1 : vector<8x256xf32>, i32 -> vector<8x256xf32>
    %103 = vector.broadcast %33 : vector<1x256xf32> to vector<8x256xf32>
    %104 = arith.mulf %102, %103 : vector<8x256xf32>
    %105 = vector.extract_strided_slice %3 {offsets = [0, 0], sizes = [8, 1], strides = [1, 1]} : vector<8x9xf32> to vector<8x1xf32>
    %106 = vector.broadcast %105 : vector<8x1xf32> to vector<8x256xf32>
    %107 = arith.mulf %101, %106 : vector<8x256xf32>
    %108 = vector.extract_strided_slice %3 {offsets = [0, 1], sizes = [8, 1], strides = [1, 1]} : vector<8x9xf32> to vector<8x1xf32>
    %109 = vector.broadcast %108 : vector<8x1xf32> to vector<8x256xf32>
    %110 = arith.mulf %98, %109 : vector<8x256xf32>
    %111 = arith.addf %107, %110 : vector<8x256xf32>
    %112 = vector.extract_strided_slice %3 {offsets = [0, 2], sizes = [8, 1], strides = [1, 1]} : vector<8x9xf32> to vector<8x1xf32>
    %113 = vector.broadcast %112 : vector<8x1xf32> to vector<8x256xf32>
    %114 = arith.mulf %104, %113 : vector<8x256xf32>
    %115 = arith.addf %111, %114 : vector<8x256xf32>
    %116 = vector.extract_strided_slice %3 {offsets = [0, 3], sizes = [8, 1], strides = [1, 1]} : vector<8x9xf32> to vector<8x1xf32>
    %117 = vector.broadcast %116 : vector<8x1xf32> to vector<8x256xf32>
    %118 = arith.mulf %101, %117 : vector<8x256xf32>
    %119 = vector.extract_strided_slice %3 {offsets = [0, 4], sizes = [8, 1], strides = [1, 1]} : vector<8x9xf32> to vector<8x1xf32>
    %120 = vector.broadcast %119 : vector<8x1xf32> to vector<8x256xf32>
    %121 = arith.mulf %98, %120 : vector<8x256xf32>
    %122 = arith.addf %118, %121 : vector<8x256xf32>
    %123 = vector.extract_strided_slice %3 {offsets = [0, 5], sizes = [8, 1], strides = [1, 1]} : vector<8x9xf32> to vector<8x1xf32>
    %124 = vector.broadcast %123 : vector<8x1xf32> to vector<8x256xf32>
    %125 = arith.mulf %104, %124 : vector<8x256xf32>
    %126 = arith.addf %122, %125 : vector<8x256xf32>
    %127 = vector.extract_strided_slice %3 {offsets = [0, 6], sizes = [8, 1], strides = [1, 1]} : vector<8x9xf32> to vector<8x1xf32>
    %128 = vector.broadcast %127 : vector<8x1xf32> to vector<8x256xf32>
    %129 = arith.mulf %101, %128 : vector<8x256xf32>
    %130 = vector.extract_strided_slice %3 {offsets = [0, 7], sizes = [8, 1], strides = [1, 1]} : vector<8x9xf32> to vector<8x1xf32>
    %131 = vector.broadcast %130 : vector<8x1xf32> to vector<8x256xf32>
    %132 = arith.mulf %98, %131 : vector<8x256xf32>
    %133 = arith.addf %129, %132 : vector<8x256xf32>
    %134 = vector.extract_strided_slice %3 {offsets = [0, 8], sizes = [8, 1], strides = [1, 1]} : vector<8x9xf32> to vector<8x1xf32>
    %135 = vector.broadcast %134 : vector<8x1xf32> to vector<8x256xf32>
    %136 = arith.mulf %104, %135 : vector<8x256xf32>
    %137 = arith.addf %133, %136 : vector<8x256xf32>
    %c16_i32_34 = arith.constant 16 : i32
    %138 = tpu.dynamic_rotate %115 by %c16_i32_34 dim 1 : vector<8x256xf32>, i32 -> vector<8x256xf32>
    %139 = vector.broadcast %37 : vector<1x256xf32> to vector<8x256xf32>
    %140 = arith.mulf %138, %139 : vector<8x256xf32>
    %141 = arith.addf %126, %140 : vector<8x256xf32>
    %c240_i32_35 = arith.constant 240 : i32
    %142 = tpu.dynamic_rotate %137 by %c240_i32_35 dim 1 : vector<8x256xf32>, i32 -> vector<8x256xf32>
    %143 = vector.broadcast %41 : vector<1x256xf32> to vector<8x256xf32>
    %144 = arith.mulf %142, %143 : vector<8x256xf32>
    %145 = arith.addf %141, %144 : vector<8x256xf32>
    %cst_36 = arith.constant dense<0.000000e+00> : vector<8x256xf32>
    %146 = tpu.matmul %4, %145, %cst_36 {dimension_numbers = #tpu.dot_dimension_numbers<[1], [0], [0], [1], [0, 0, 1, 1], [], []>} : vector<8x8xf32>, vector<8x256xf32>, vector<8x256xf32> -> vector<8x256xf32>
    %147 = vector.broadcast %5 : vector<8x1xf32> to vector<8x256xf32>
    %148 = arith.addf %146, %147 : vector<8x256xf32>
    %cst_37 = arith.constant 0.000000e+00 : f32
    %149 = vector.broadcast %cst_37 : f32 to vector<8x256xf32>
    %150 = arith.maximumf %148, %149 : vector<8x256xf32>
    %c1_i32_38 = arith.constant 1 : i32
    %151 = tpu.dynamic_rotate %150 by %c1_i32_38 dim 1 : vector<8x256xf32>, i32 -> vector<8x256xf32>
    %152 = vector.broadcast %29 : vector<1x256xf32> to vector<8x256xf32>
    %153 = arith.mulf %151, %152 : vector<8x256xf32>
    %c255_i32_39 = arith.constant 255 : i32
    %154 = tpu.dynamic_rotate %150 by %c255_i32_39 dim 1 : vector<8x256xf32>, i32 -> vector<8x256xf32>
    %155 = vector.broadcast %33 : vector<1x256xf32> to vector<8x256xf32>
    %156 = arith.mulf %154, %155 : vector<8x256xf32>
    %157 = vector.extract_strided_slice %6 {offsets = [0, 0], sizes = [8, 1], strides = [1, 1]} : vector<8x9xf32> to vector<8x1xf32>
    %158 = vector.broadcast %157 : vector<8x1xf32> to vector<8x256xf32>
    %159 = arith.mulf %153, %158 : vector<8x256xf32>
    %160 = vector.extract_strided_slice %6 {offsets = [0, 1], sizes = [8, 1], strides = [1, 1]} : vector<8x9xf32> to vector<8x1xf32>
    %161 = vector.broadcast %160 : vector<8x1xf32> to vector<8x256xf32>
    %162 = arith.mulf %150, %161 : vector<8x256xf32>
    %163 = arith.addf %159, %162 : vector<8x256xf32>
    %164 = vector.extract_strided_slice %6 {offsets = [0, 2], sizes = [8, 1], strides = [1, 1]} : vector<8x9xf32> to vector<8x1xf32>
    %165 = vector.broadcast %164 : vector<8x1xf32> to vector<8x256xf32>
    %166 = arith.mulf %156, %165 : vector<8x256xf32>
    %167 = arith.addf %163, %166 : vector<8x256xf32>
    %168 = vector.extract_strided_slice %6 {offsets = [0, 3], sizes = [8, 1], strides = [1, 1]} : vector<8x9xf32> to vector<8x1xf32>
    %169 = vector.broadcast %168 : vector<8x1xf32> to vector<8x256xf32>
    %170 = arith.mulf %153, %169 : vector<8x256xf32>
    %171 = vector.extract_strided_slice %6 {offsets = [0, 4], sizes = [8, 1], strides = [1, 1]} : vector<8x9xf32> to vector<8x1xf32>
    %172 = vector.broadcast %171 : vector<8x1xf32> to vector<8x256xf32>
    %173 = arith.mulf %150, %172 : vector<8x256xf32>
    %174 = arith.addf %170, %173 : vector<8x256xf32>
    %175 = vector.extract_strided_slice %6 {offsets = [0, 5], sizes = [8, 1], strides = [1, 1]} : vector<8x9xf32> to vector<8x1xf32>
    %176 = vector.broadcast %175 : vector<8x1xf32> to vector<8x256xf32>
    %177 = arith.mulf %156, %176 : vector<8x256xf32>
    %178 = arith.addf %174, %177 : vector<8x256xf32>
    %179 = vector.extract_strided_slice %6 {offsets = [0, 6], sizes = [8, 1], strides = [1, 1]} : vector<8x9xf32> to vector<8x1xf32>
    %180 = vector.broadcast %179 : vector<8x1xf32> to vector<8x256xf32>
    %181 = arith.mulf %153, %180 : vector<8x256xf32>
    %182 = vector.extract_strided_slice %6 {offsets = [0, 7], sizes = [8, 1], strides = [1, 1]} : vector<8x9xf32> to vector<8x1xf32>
    %183 = vector.broadcast %182 : vector<8x1xf32> to vector<8x256xf32>
    %184 = arith.mulf %150, %183 : vector<8x256xf32>
    %185 = arith.addf %181, %184 : vector<8x256xf32>
    %186 = vector.extract_strided_slice %6 {offsets = [0, 8], sizes = [8, 1], strides = [1, 1]} : vector<8x9xf32> to vector<8x1xf32>
    %187 = vector.broadcast %186 : vector<8x1xf32> to vector<8x256xf32>
    %188 = arith.mulf %156, %187 : vector<8x256xf32>
    %189 = arith.addf %185, %188 : vector<8x256xf32>
    %c16_i32_40 = arith.constant 16 : i32
    %190 = tpu.dynamic_rotate %167 by %c16_i32_40 dim 1 : vector<8x256xf32>, i32 -> vector<8x256xf32>
    %191 = vector.broadcast %37 : vector<1x256xf32> to vector<8x256xf32>
    %192 = arith.mulf %190, %191 : vector<8x256xf32>
    %193 = arith.addf %178, %192 : vector<8x256xf32>
    %c240_i32_41 = arith.constant 240 : i32
    %194 = tpu.dynamic_rotate %189 by %c240_i32_41 dim 1 : vector<8x256xf32>, i32 -> vector<8x256xf32>
    %195 = vector.broadcast %41 : vector<1x256xf32> to vector<8x256xf32>
    %196 = arith.mulf %194, %195 : vector<8x256xf32>
    %197 = arith.addf %193, %196 : vector<8x256xf32>
    %cst_42 = arith.constant dense<0.000000e+00> : vector<4x256xf32>
    %198 = tpu.matmul %7, %197, %cst_42 {dimension_numbers = #tpu.dot_dimension_numbers<[1], [0], [0], [1], [0, 0, 1, 1], [], []>} : vector<4x8xf32>, vector<8x256xf32>, vector<4x256xf32> -> vector<4x256xf32>
    %199 = vector.broadcast %8 : vector<4x1xf32> to vector<4x256xf32>
    %200 = arith.addf %198, %199 : vector<4x256xf32>
    %cst_43 = arith.constant 0.000000e+00 : f32
    %201 = vector.broadcast %cst_43 : f32 to vector<4x256xf32>
    %202 = arith.maximumf %200, %201 : vector<4x256xf32>
    %c0_44 = arith.constant 0 : index
    %c0_45 = arith.constant 0 : index
    %c0_46 = arith.constant 0 : index
    %203 = vector.load %arg12[%c0_44, %c0_45, %c0_46] : memref<1x4x256xf32, #tpu.memory_space<vmem>>, vector<1x4x256xf32>
    %204 = vector.shape_cast %203 : vector<1x4x256xf32> to vector<4x256xf32>
    %205 = vector.shape_cast %202 : vector<4x256xf32> to vector<1x4x256xf32>
    tpu.vector_store %arg12[%c0_44, %c0_45, %c0_46], %205 {strides = array<i32>} : memref<1x4x256xf32, #tpu.memory_space<vmem>>, vector<1x4x256xf32>,
    return
  }
  func.func @transform_0(%arg0: i32) -> (i32, i32, i32) {
    %c0_i32 = arith.constant 0 : i32
    %c0_i32_0 = arith.constant 0 : i32
    %c0_i32_1 = arith.constant 0 : i32
    return %arg0, %c0_i32, %c0_i32_0 : i32, i32, i32
  }
  func.func @transform_1(%arg0: i32) -> (i32, i32, i32) {
    %c0_i32 = arith.constant 0 : i32
    %c0_i32_0 = arith.constant 0 : i32
    %c0_i32_1 = arith.constant 0 : i32
    return %arg0, %c0_i32, %c0_i32_0 : i32, i32, i32
  }
  func.func @transform_2(%arg0: i32) -> (i32, i32) {
    %c0_i32 = arith.constant 0 : i32
    %c0_i32_0 = arith.constant 0 : i32
    %c0_i32_1 = arith.constant 0 : i32
    return %c0_i32, %c0_i32_0 : i32, i32
  }
  func.func @transform_3(%arg0: i32) -> (i32, i32) {
    %c0_i32 = arith.constant 0 : i32
    %c0_i32_0 = arith.constant 0 : i32
    %c0_i32_1 = arith.constant 0 : i32
    return %c0_i32, %c0_i32_0 : i32, i32
  }
  func.func @transform_4(%arg0: i32) -> (i32, i32) {
    %c0_i32 = arith.constant 0 : i32
    %c0_i32_0 = arith.constant 0 : i32
    %c0_i32_1 = arith.constant 0 : i32
    return %c0_i32, %c0_i32_0 : i32, i32
  }
  func.func @transform_5(%arg0: i32) -> (i32, i32) {
    %c0_i32 = arith.constant 0 : i32
    %c0_i32_0 = arith.constant 0 : i32
    %c0_i32_1 = arith.constant 0 : i32
    return %c0_i32, %c0_i32_0 : i32, i32
  }
  func.func @transform_6(%arg0: i32) -> (i32, i32) {
    %c0_i32 = arith.constant 0 : i32
    %c0_i32_0 = arith.constant 0 : i32
    %c0_i32_1 = arith.constant 0 : i32
    return %c0_i32, %c0_i32_0 : i32, i32
  }
  func.func @transform_7(%arg0: i32) -> (i32, i32) {
    %c0_i32 = arith.constant 0 : i32
    %c0_i32_0 = arith.constant 0 : i32
    %c0_i32_1 = arith.constant 0 : i32
    return %c0_i32, %c0_i32_0 : i32, i32
  }
  func.func @transform_8(%arg0: i32) -> (i32, i32) {
    %c0_i32 = arith.constant 0 : i32
    %c0_i32_0 = arith.constant 0 : i32
    %c0_i32_1 = arith.constant 0 : i32
    return %c0_i32, %c0_i32_0 : i32, i32
  }
  func.func @transform_9(%arg0: i32) -> (i32, i32) {
    %c0_i32 = arith.constant 0 : i32
    %c0_i32_0 = arith.constant 0 : i32
    %c0_i32_1 = arith.constant 0 : i32
    return %c0_i32, %c0_i32_0 : i32, i32
  }
  func.func @transform_10(%arg0: i32) -> (i32, i32) {
    %c0_i32 = arith.constant 0 : i32
    %c0_i32_0 = arith.constant 0 : i32
    %c0_i32_1 = arith.constant 0 : i32
    return %c0_i32, %c0_i32_0 : i32, i32
  }
  func.func @transform_11(%arg0: i32) -> (i32, i32, i32) {
    %c0_i32 = arith.constant 0 : i32
    %c0_i32_0 = arith.constant 0 : i32
    %c0_i32_1 = arith.constant 0 : i32
    return %arg0, %c0_i32, %c0_i32_0 : i32, i32, i32
  }
}

</mosaic_0001>

<llo_original>
// kernel: tpu_custom_call.1
$region0: #{tpu_custom_call.1}
  #allocation0 [shape = 'u32[]', space=smem, size = 0x4, offset = 0x4, fixed_abs, tag = 'smem constant byte address 0x4 - core index']
  #allocation1 [shape = 'u32[144,128]{1,0:T(1,128)}', space=vmem, size = 0x12000, scoped, tag = 'internal scratch']
  %s0 = inlined_call_operand.hbm [shape: f32[2,8,256], index: 0, kind: input, shape index: {}]
  %s1 = inlined_call_operand.hbm [shape: f32[2,8,256], index: 1, kind: input, shape index: {}]
  %s2 = inlined_call_operand.vmem [shape: f32[8,9], index: 2, kind: input, shape index: {}]
  %s3 = inlined_call_operand.vmem [shape: f32[8,8], index: 3, kind: input, shape index: {}]
  %s4 = inlined_call_operand.vmem [shape: f32[8,1], index: 4, kind: input, shape index: {}]
  %s5 = inlined_call_operand.vmem [shape: f32[8,9], index: 5, kind: input, shape index: {}]
  %s6 = inlined_call_operand.vmem [shape: f32[8,8], index: 6, kind: input, shape index: {}]
  %s7 = inlined_call_operand.vmem [shape: f32[8,1], index: 7, kind: input, shape index: {}]
  %s8 = inlined_call_operand.vmem [shape: f32[8,9], index: 8, kind: input, shape index: {}]
  %s9 = inlined_call_operand.vmem [shape: f32[4,8], index: 9, kind: input, shape index: {}]
  %s10 = inlined_call_operand.vmem [shape: f32[4,1], index: 10, kind: input, shape index: {}]
  %s11 = inlined_call_operand.hbm [shape: f32[2,4,256], index: 11, kind: output, shape index: {}]
  %s12 = sld [smem:[#allocation0]]
  $region85: #{tpu_custom_call.1} parent=0
    _
  %s14 = ssub.s32 1, %s12
  %s15 = scalar_select 0, %s14, %s12
  $region1: #{tpu_custom_call.1} parent=0
    #allocation2 [shape = 'u8[16384]{0}', space=vmem, size = 0x4000, scoped, tag = 'input window, operand 0']
    #allocation3 [shape = 's32[2]{0}', space=sflag, size = 0x8, scoped, tag = 'scoped memory for tpu_custom_call.1']
    #allocation4 [shape = 's32[2]{0}', space=sflag, size = 0x8, scoped, tag = 'scoped memory for tpu_custom_call.1']
    #allocation5 [shape = 'u8[16384]{0}', space=vmem, size = 0x4000, scoped, tag = 'input window, operand 1']
    #allocation6 [shape = 's32[2]{0}', space=sflag, size = 0x8, scoped, tag = 'scoped memory for tpu_custom_call.1']
    #allocation7 [shape = 'u8[8192]{0}', space=vmem, size = 0x2000, scoped, tag = 'output window, operand 0']
    %16 = vsyncpa [#allocation3], 0
    %s17 = scalar_lea.sflag [#allocation3], 1
    %18 = vsyncpa %s17, 0
    %19 = vsyncpa [#allocation6], 0
    %s20 = scalar_lea.sflag [#allocation6], 1
    %21 = vsyncpa %s20, 0
    %22 = vsyncpa [#allocation4], 0
    %s23 = scalar_lea.sflag [#allocation4], 1
    %24 = vsyncpa %s23, 0
    loop: start=0, step=1, limit=4
    $region2: #{tpu_custom_call.1} parent=1 // loop_pre_header
      _
    $region3: #{tpu_custom_call.1} parent=1 // loop_header
      %s26 = sphi 0, %s30
      %p27 = scmp.ge.s32.totalorder %s26, 4
      %s36 = sphi 0, %s38
      %s39 = sphi 0, %s36
      %s40 = sphi 0, %s39
      %s56 = sphi 0, %s40
      %s62 = sphi 0, %s64
      %s65 = sphi 0, %s62
      %s66 = sphi 0, %s65
      %s82 = sphi 0, %s66
      %s86 = sphi 0, %s86
      %s88 = sphi 0, %s86
      %s89 = sphi 0, %s88
      %s103 = sphi 0, %s89
      %s107 = sphi 0, %s107
      %s109 = sphi 0, %s107
      %s110 = sphi 0, %s109
      %s124 = sphi 0, %s110
      %s128 = sphi 0, %s128
      %s130 = sphi 0, %s128
      %s131 = sphi 0, %s130
      %s145 = sphi 0, %s131
      %s149 = sphi 0, %s149
      %s151 = sphi 0, %s149
      %s152 = sphi 0, %s151
      %s166 = sphi 0, %s152
      %s170 = sphi 0, %s170
      %s172 = sphi 0, %s170
      %s173 = sphi 0, %s172
      %s187 = sphi 0, %s173
      %s191 = sphi 0, %s191
      %s193 = sphi 0, %s191
      %s194 = sphi 0, %s193
      %s208 = sphi 0, %s194
      %s212 = sphi 0, %s212
      %s214 = sphi 0, %s212
      %s215 = sphi 0, %s214
      %s229 = sphi 0, %s215
      %s233 = sphi 0, %s233
      %s235 = sphi 0, %s233
      %s236 = sphi 0, %s235
      %s250 = sphi 0, %s236
      %s254 = sphi 0, %s254
      %s256 = sphi 0, %s254
      %s257 = sphi 0, %s256
      %s271 = sphi 0, %s257
      %s277 = sphi 0, %s279
      %s280 = sphi 0, %s277
      %s281 = sphi 0, %s280
      %s297 = sphi 0, %s281
    $region4: #{tpu_custom_call.1} parent=1 // loop_header_branch
      %29 = sbr.rel (%p27) target = $region8
    $region5: #{tpu_custom_call.1} parent=1 // loop_body
      %s31 = ssub.s32 %s26, 1
      %s32 = ssub.s32 %s26, 2
      %s33 = sadd.s32 %s26, 1
      %s34 = ssub.s32 %s26, %s33
      %p35 = scmp.eq.s32.totalorder %s34, 0
      %s37 = sadd.s32 %s36, 1
      %s38 = scalar_select %p35, %s36, %s37
      %p41 = pneg %p35
      %p42 = scmp.eq.s32.totalorder %s26, 1
      %p43 = por %p41, %p42
      %p44 = scmp.ne.s32.totalorder %s36, %s39
      %p45 = scmp.eq.s32.totalorder %s26, 0
      %p46 = por %p44, %p45
      %p47 = scmp.ne.s32.totalorder %s36, %s39
      %p48 = scmp.eq.s32.totalorder %s31, 1
      %p49 = por %p47, %p48
      %p50 = scmp.ne.s32.totalorder %s39, %s40
      %p51 = scmp.eq.s32.totalorder %s31, 0
      %p52 = por %p50, %p51
      %p53 = scmp.ne.s32.totalorder %s39, %s40
      %p54 = scmp.eq.s32.totalorder %s32, 1
      %p55 = por %p53, %p54
      %p57 = scmp.ne.s32.totalorder %s40, %s56
      %p58 = scmp.eq.s32.totalorder %s32, 0
      %p59 = por %p57, %p58
      %s60 = ssub.s32 %s26, %s33
      %p61 = scmp.eq.s32.totalorder %s60, 0
      %s63 = sadd.s32 %s62, 1
      %s64 = scalar_select %p61, %s62, %s63
      %p67 = pneg %p61
      %p68 = scmp.eq.s32.totalorder %s26, 1
      %p69 = por %p67, %p68
      %p70 = scmp.ne.s32.totalorder %s62, %s65
      %p71 = scmp.eq.s32.totalorder %s26, 0
      %p72 = por %p70, %p71
      %p73 = scmp.ne.s32.totalorder %s62, %s65
      %p74 = scmp.eq.s32.totalorder %s31, 1
      %p75 = por %p73, %p74
      %p76 = scmp.ne.s32.totalorder %s65, %s66
      %p77 = scmp.eq.s32.totalorder %s31, 0
      %p78 = por %p76, %p77
      %p79 = scmp.ne.s32.totalorder %s65, %s66
      %p80 = scmp.eq.s32.totalorder %s32, 1
      %p81 = por %p79, %p80
      %p83 = scmp.ne.s32.totalorder %s66, %s82
      %p84 = scmp.eq.s32.totalorder %s32, 0
      %p85 = por %p83, %p84
      %s87 = sadd.s32 %s86, 1
      %p90 = scmp.eq.s32.totalorder %s26, 1
      %p91 = scmp.ne.s32.totalorder %s86, %s88
      %p92 = scmp.eq.s32.totalorder %s26, 0
      %p93 = por %p91, %p92
      %p94 = scmp.ne.s32.totalorder %s86, %s88
      %p95 = scmp.eq.s32.totalorder %s31, 1
      %p96 = por %p94, %p95
      %p97 = scmp.ne.s32.totalorder %s88, %s89
      %p98 = scmp.eq.s32.totalorder %s31, 0
      %p99 = por %p97, %p98
      %p100 = scmp.ne.s32.totalorder %s88, %s89
      %p101 = scmp.eq.s32.totalorder %s32, 1
      %p102 = por %p100, %p101
      %p104 = scmp.ne.s32.totalorder %s89, %s103
      %p105 = scmp.eq.s32.totalorder %s32, 0
      %p106 = por %p104, %p105
      %s108 = sadd.s32 %s107, 1
      %p111 = scmp.eq.s32.totalorder %s26, 1
      %p112 = scmp.ne.s32.totalorder %s107, %s109
      %p113 = scmp.eq.s32.totalorder %s26, 0
      %p114 = por %p112, %p113
      %p115 = scmp.ne.s32.totalorder %s107, %s109
      %p116 = scmp.eq.s32.totalorder %s31, 1
      %p117 = por %p115, %p116
      %p118 = scmp.ne.s32.totalorder %s109, %s110
      %p119 = scmp.eq.s32.totalorder %s31, 0
      %p120 = por %p118, %p119
      %p121 = scmp.ne.s32.totalorder %s109, %s110
      %p122 = scmp.eq.s32.totalorder %s32, 1
      %p123 = por %p121, %p122
      %p125 = scmp.ne.s32.totalorder %s110, %s124
      %p126 = scmp.eq.s32.totalorder %s32, 0
      %p127 = por %p125, %p126
      %s129 = sadd.s32 %s128, 1
      %p132 = scmp.eq.s32.totalorder %s26, 1
      %p133 = scmp.ne.s32.totalorder %s128, %s130
      %p134 = scmp.eq.s32.totalorder %s26, 0
      %p135 = por %p133, %p134
      %p136 = scmp.ne.s32.totalorder %s128, %s130
      %p137 = scmp.eq.s32.totalorder %s31, 1
      %p138 = por %p136, %p137
      %p139 = scmp.ne.s32.totalorder %s130, %s131
      %p140 = scmp.eq.s32.totalorder %s31, 0
      %p141 = por %p139, %p140
      %p142 = scmp.ne.s32.totalorder %s130, %s131
      %p143 = scmp.eq.s32.totalorder %s32, 1
      %p144 = por %p142, %p143
      %p146 = scmp.ne.s32.totalorder %s131, %s145
      %p147 = scmp.eq.s32.totalorder %s32, 0
      %p148 = por %p146, %p147
      %s150 = sadd.s32 %s149, 1
      %p153 = scmp.eq.s32.totalorder %s26, 1
      %p154 = scmp.ne.s32.totalorder %s149, %s151
      %p155 = scmp.eq.s32.totalorder %s26, 0
      %p156 = por %p154, %p155
      %p157 = scmp.ne.s32.totalorder %s149, %s151
      %p158 = scmp.eq.s32.totalorder %s31, 1
      %p159 = por %p157, %p158
      %p160 = scmp.ne.s32.totalorder %s151, %s152
      %p161 = scmp.eq.s32.totalorder %s31, 0
      %p162 = por %p160, %p161
      %p163 = scmp.ne.s32.totalorder %s151, %s152
      %p164 = scmp.eq.s32.totalorder %s32, 1
      %p165 = por %p163, %p164
      %p167 = scmp.ne.s32.totalorder %s152, %s166
      %p168 = scmp.eq.s32.totalorder %s32, 0
      %p169 = por %p167, %p168
      %s171 = sadd.s32 %s170, 1
      %p174 = scmp.eq.s32.totalorder %s26, 1
      %p175 = scmp.ne.s32.totalorder %s170, %s172
      %p176 = scmp.eq.s32.totalorder %s26, 0
      %p177 = por %p175, %p176
      %p178 = scmp.ne.s32.totalorder %s170, %s172
      %p179 = scmp.eq.s32.totalorder %s31, 1
      %p180 = por %p178, %p179
      %p181 = scmp.ne.s32.totalorder %s172, %s173
      %p182 = scmp.eq.s32.totalorder %s31, 0
      %p183 = por %p181, %p182
      %p184 = scmp.ne.s32.totalorder %s172, %s173
      %p185 = scmp.eq.s32.totalorder %s32, 1
      %p186 = por %p184, %p185
      %p188 = scmp.ne.s32.totalorder %s173, %s187
      %p189 = scmp.eq.s32.totalorder %s32, 0
      %p190 = por %p188, %p189
      %s192 = sadd.s32 %s191, 1
      %p195 = scmp.eq.s32.totalorder %s26, 1
      %p196 = scmp.ne.s32.totalorder %s191, %s193
      %p197 = scmp.eq.s32.totalorder %s26, 0
      %p198 = por %p196, %p197
      %p199 = scmp.ne.s32.totalorder %s191, %s193
      %p200 = scmp.eq.s32.totalorder %s31, 1
      %p201 = por %p199, %p200
      %p202 = scmp.ne.s32.totalorder %s193, %s194
      %p203 = scmp.eq.s32.totalorder %s31, 0
      %p204 = por %p202, %p203
      %p205 = scmp.ne.s32.totalorder %s193, %s194
      %p206 = scmp.eq.s32.totalorder %s32, 1
      %p207 = por %p205, %p206
      %p209 = scmp.ne.s32.totalorder %s194, %s208
      %p210 = scmp.eq.s32.totalorder %s32, 0
      %p211 = por %p209, %p210
      %s213 = sadd.s32 %s212, 1
      %p216 = scmp.eq.s32.totalorder %s26, 1
      %p217 = scmp.ne.s32.totalorder %s212, %s214
      %p218 = scmp.eq.s32.totalorder %s26, 0
      %p219 = por %p217, %p218
      %p220 = scmp.ne.s32.totalorder %s212, %s214
      %p221 = scmp.eq.s32.totalorder %s31, 1
      %p222 = por %p220, %p221
      %p223 = scmp.ne.s32.totalorder %s214, %s215
      %p224 = scmp.eq.s32.totalorder %s31, 0
      %p225 = por %p223, %p224
      %p226 = scmp.ne.s32.totalorder %s214, %s215
      %p227 = scmp.eq.s32.totalorder %s32, 1
      %p228 = por %p226, %p227
      %p230 = scmp.ne.s32.totalorder %s215, %s229
      %p231 = scmp.eq.s32.totalorder %s32, 0
      %p232 = por %p230, %p231
      %s234 = sadd.s32 %s233, 1
      %p237 = scmp.eq.s32.totalorder %s26, 1
      %p238 = scmp.ne.s32.totalorder %s233, %s235
      %p239 = scmp.eq.s32.totalorder %s26, 0
      %p240 = por %p238, %p239
      %p241 = scmp.ne.s32.totalorder %s233, %s235
      %p242 = scmp.eq.s32.totalorder %s31, 1
      %p243 = por %p241, %p242
      %p244 = scmp.ne.s32.totalorder %s235, %s236
      %p245 = scmp.eq.s32.totalorder %s31, 0
      %p246 = por %p244, %p245
      %p247 = scmp.ne.s32.totalorder %s235, %s236
      %p248 = scmp.eq.s32.totalorder %s32, 1
      %p249 = por %p247, %p248
      %p251 = scmp.ne.s32.totalorder %s236, %s250
      %p252 = scmp.eq.s32.totalorder %s32, 0
      %p253 = por %p251, %p252
      %s255 = sadd.s32 %s254, 1
      %p258 = scmp.eq.s32.totalorder %s26, 1
      %p259 = scmp.ne.s32.totalorder %s254, %s256
      %p260 = scmp.eq.s32.totalorder %s26, 0
      %p261 = por %p259, %p260
      %p262 = scmp.ne.s32.totalorder %s254, %s256
      %p263 = scmp.eq.s32.totalorder %s31, 1
      %p264 = por %p262, %p263
      %p265 = scmp.ne.s32.totalorder %s256, %s257
      %p266 = scmp.eq.s32.totalorder %s31, 0
      %p267 = por %p265, %p266
      %p268 = scmp.ne.s32.totalorder %s256, %s257
      %p269 = scmp.eq.s32.totalorder %s32, 1
      %p270 = por %p268, %p269
      %p272 = scmp.ne.s32.totalorder %s257, %s271
      %p273 = scmp.eq.s32.totalorder %s32, 0
      %p274 = por %p272, %p273
      %s275 = ssub.s32 %s26, %s33
      %p276 = scmp.eq.s32.totalorder %s275, 0
      %s278 = sadd.s32 %s277, 1
      %s279 = scalar_select %p276, %s277, %s278
      %p282 = pneg %p276
      %p283 = scmp.eq.s32.totalorder %s26, 1
      %p284 = por %p282, %p283
      %p285 = scmp.ne.s32.totalorder %s277, %s280
      %p286 = scmp.eq.s32.totalorder %s26, 0
      %p287 = por %p285, %p286
      %p288 = scmp.ne.s32.totalorder %s277, %s280
      %p289 = scmp.eq.s32.totalorder %s31, 1
      %p290 = por %p288, %p289
      %p291 = scmp.ne.s32.totalorder %s280, %s281
      %p292 = scmp.eq.s32.totalorder %s31, 0
      %p293 = por %p291, %p292
      %p294 = scmp.ne.s32.totalorder %s280, %s281
      %p295 = scmp.eq.s32.totalorder %s32, 1
      %p296 = por %p294, %p295
      %p298 = scmp.ne.s32.totalorder %s281, %s297
      %p299 = scmp.eq.s32.totalorder %s32, 0
      %p300 = por %p298, %p299
      %p301 = scmp.le.s32.totalorder 1, %s26
      %p302 = scmp.lt.s32.totalorder %s26, 3
      %p303 = pnand %p301, %p302
      %p304 = pneg %p303
      // Predicated region
      $region9: #{tpu_custom_call.1} parent=5 // pred_check
        _
      $region10: #{tpu_custom_call.1} parent=5 // pred_check_branch
        %306 = sbr.rel (%p303) target = $region12
      $region11: #{tpu_custom_call.1} parent=5 // pred_region
        %s307 = ssub.s32 %s26, 1
        // Predicated region
        $region13: #{tpu_custom_call.1} parent=11 // pred_check
          %p308 = pneg %p99
        $region14: #{tpu_custom_call.1} parent=11 // pred_check_branch
          %310 = sbr.rel (%p308) target = $region16
        $region15: #{tpu_custom_call.1} parent=11 // pred_region
          _
        $region16: #{tpu_custom_call.1} parent=11 // pred_fallthru
          _
        // Predicated region
        $region17: #{tpu_custom_call.1} parent=11 // pred_check
          %p311 = pneg %p120
        $region18: #{tpu_custom_call.1} parent=11 // pred_check_branch
          %313 = sbr.rel (%p311) target = $region20
        $region19: #{tpu_custom_call.1} parent=11 // pred_region
          _
        $region20: #{tpu_custom_call.1} parent=11 // pred_fallthru
          _
        // Predicated region
        $region21: #{tpu_custom_call.1} parent=11 // pred_check
          %p314 = pneg %p141
        $region22: #{tpu_custom_call.1} parent=11 // pred_check_branch
          %316 = sbr.rel (%p314) target = $region24
        $region23: #{tpu_custom_call.1} parent=11 // pred_region
          _
        $region24: #{tpu_custom_call.1} parent=11 // pred_fallthru
          _
        // Predicated region
        $region25: #{tpu_custom_call.1} parent=11 // pred_check
          %p317 = pneg %p162
        $region26: #{tpu_custom_call.1} parent=11 // pred_check_branch
          %319 = sbr.rel (%p317) target = $region28
        $region27: #{tpu_custom_call.1} parent=11 // pred_region
          _
        $region28: #{tpu_custom_call.1} parent=11 // pred_fallthru
          _
        // Predicated region
        $region29: #{tpu_custom_call.1} parent=11 // pred_check
          %p320 = pneg %p183
        $region30: #{tpu_custom_call.1} parent=11 // pred_check_branch
          %322 = sbr.rel (%p320) target = $region32
        $region31: #{tpu_custom_call.1} parent=11 // pred_region
          _
        $region32: #{tpu_custom_call.1} parent=11 // pred_fallthru
          _
        // Predicated region
        $region33: #{tpu_custom_call.1} parent=11 // pred_check
          %p323 = pneg %p204
        $region34: #{tpu_custom_call.1} parent=11 // pred_check_branch
          %325 = sbr.rel (%p323) target = $region36
        $region35: #{tpu_custom_call.1} parent=11 // pred_region
          _
        $region36: #{tpu_custom_call.1} parent=11 // pred_fallthru
          _
        // Predicated region
        $region37: #{tpu_custom_call.1} parent=11 // pred_check
          %p326 = pneg %p225
        $region38: #{tpu_custom_call.1} parent=11 // pred_check_branch
          %328 = sbr.rel (%p326) target = $region40
        $region39: #{tpu_custom_call.1} parent=11 // pred_region
          _
        $region40: #{tpu_custom_call.1} parent=11 // pred_fallthru
          _
        // Predicated region
        $region41: #{tpu_custom_call.1} parent=11 // pred_check
          %p329 = pneg %p246
        $region42: #{tpu_custom_call.1} parent=11 // pred_check_branch
          %331 = sbr.rel (%p329) target = $region44
        $region43: #{tpu_custom_call.1} parent=11 // pred_region
          _
        $region44: #{tpu_custom_call.1} parent=11 // pred_fallthru
          _
        // Predicated region
        $region45: #{tpu_custom_call.1} parent=11 // pred_check
          %p332 = pneg %p267
        $region46: #{tpu_custom_call.1} parent=11 // pred_check_branch
          %334 = sbr.rel (%p332) target = $region48
        $region47: #{tpu_custom_call.1} parent=11 // pred_region
          _
        $region48: #{tpu_custom_call.1} parent=11 // pred_fallthru
          _
      $region12: #{tpu_custom_call.1} parent=5 // pred_fallthru
        _
      %p335 = scmp.lt.s32.totalorder %s26, 2
      // Predicated region
      $region49: #{tpu_custom_call.1} parent=5 // pred_check
        %p336 = pneg %p335
      $region50: #{tpu_custom_call.1} parent=5 // pred_check_branch
        %338 = sbr.rel (%p336) target = $region52
      $region51: #{tpu_custom_call.1} parent=5 // pred_region
        // Predicated region
        $region53: #{tpu_custom_call.1} parent=51 // pred_check
          %p339 = pneg %p46
        $region54: #{tpu_custom_call.1} parent=51 // pred_check_branch
          %341 = sbr.rel (%p339) target = $region56
        $region55: #{tpu_custom_call.1} parent=51 // pred_region
          %s342 = sand.u32 %s36, 1
          %s343 = scalar_lea.sflag [#allocation3], %s342
          %s344 = sand.u32 %s36, 1
          %s345 = smul.addr %s344, 16
          %s346 = scalar_lea.vmem [#allocation2], %s345
          %s348 = ssub.s32 256, 256
          %349 = vsyncadd %s343, %s348
          %s350 = smul.addr %s26, 2
          %s351 = smul.addr %s350, 128
          %s352 = scalar_lea.hbm %s0, %s351
          %s354 = sshll.u32 %s346, 4
          %s355 = int_to_ptr.vmem [resolvable:$true] %s354
          %357 = dma.hbm_to_vmem [thread:$0]  %s352, 256, %s355, %s343
        $region56: #{tpu_custom_call.1} parent=51 // pred_fallthru
          _
        // Predicated region
        $region57: #{tpu_custom_call.1} parent=51 // pred_check
          %p358 = pneg %p72
        $region58: #{tpu_custom_call.1} parent=51 // pred_check_branch
          %360 = sbr.rel (%p358) target = $region60
        $region59: #{tpu_custom_call.1} parent=51 // pred_region
          %s361 = sand.u32 %s62, 1
          %s362 = scalar_lea.sflag [#allocation6], %s361
          %s363 = sand.u32 %s62, 1
          %s364 = smul.addr %s363, 16
          %s365 = scalar_lea.vmem [#allocation5], %s364
          %s367 = ssub.s32 256, 256
          %368 = vsyncadd %s362, %s367
          %s369 = smul.addr %s26, 2
          %s370 = smul.addr %s369, 128
          %s371 = scalar_lea.hbm %s1, %s370
          %s373 = sshll.u32 %s365, 4
          %s374 = int_to_ptr.vmem [resolvable:$true] %s373
          %376 = dma.hbm_to_vmem [thread:$0]  %s371, 256, %s374, %s362
        $region60: #{tpu_custom_call.1} parent=51 // pred_fallthru
          _
      $region52: #{tpu_custom_call.1} parent=5 // pred_fallthru
        _
      %p377 = scmp.le.s32.totalorder 1, %s26
      %p378 = scmp.lt.s32.totalorder %s26, 3
      %p379 = pnand %p377, %p378
      %p380 = pneg %p379
      // Predicated region
      $region61: #{tpu_custom_call.1} parent=5 // pred_check
        _
      $region62: #{tpu_custom_call.1} parent=5 // pred_check_branch
        %382 = sbr.rel (%p379) target = $region64
      $region63: #{tpu_custom_call.1} parent=5 // pred_region
        %s383 = ssub.s32 %s26, 1
        %s384 = sand.u32 %s39, 1
        %s385 = scalar_lea.sflag [#allocation3], %s384
        %s386 = sand.u32 %s39, 1
        %s387 = smul.addr %s386, 16
        %s388 = scalar_lea.vmem [#allocation2], %s387
        // Predicated region
        $region65: #{tpu_custom_call.1} parent=63 // pred_check
          %p389 = pneg %p52
        $region66: #{tpu_custom_call.1} parent=63 // pred_check_branch
          %391 = sbr.rel (%p389) target = $region68
        $region67: #{tpu_custom_call.1} parent=63 // pred_region
          %392 = dma.done %s385, 256
        $region68: #{tpu_custom_call.1} parent=63 // pred_fallthru
          _
        %s393 = sand.u32 %s65, 1
        %s394 = scalar_lea.sflag [#allocation6], %s393
        %s395 = sand.u32 %s65, 1
        %s396 = smul.addr %s395, 16
        %s397 = scalar_lea.vmem [#allocation5], %s396
        // Predicated region
        $region69: #{tpu_custom_call.1} parent=63 // pred_check
          %p398 = pneg %p78
        $region70: #{tpu_custom_call.1} parent=63 // pred_check_branch
          %400 = sbr.rel (%p398) target = $region72
        $region71: #{tpu_custom_call.1} parent=63 // pred_region
          %401 = dma.done %s394, 256
        $region72: #{tpu_custom_call.1} parent=63 // pred_fallthru
          _
        %s402 = sand.u32 %s39, 1
        %s403 = scalar_lea.sflag [#allocation3], %s402
        %s404 = sand.u32 %s39, 1
        %s405 = smul.addr %s404, 16
        %s406 = scalar_lea.vmem [#allocation2], %s405
        %p407 = pneg %p52
        %p408 = pneg %p49
        %s409 = sand.u32 %s65, 1
        %s410 = scalar_lea.sflag [#allocation6], %s409
        %s411 = sand.u32 %s65, 1
        %s412 = smul.addr %s411, 16
        %s413 = scalar_lea.vmem [#allocation5], %s412
        %p414 = pneg %p78
        %p415 = pneg %p75
        %p416 = pneg %p99
        %p417 = pneg %p96
        %p418 = pneg %p120
        %p419 = pneg %p117
        %p420 = pneg %p141
        %p421 = pneg %p138
        %p422 = pneg %p162
        %p423 = pneg %p159
        %p424 = pneg %p183
        %p425 = pneg %p180
        %p426 = pneg %p204
        %p427 = pneg %p201
        %p428 = pneg %p225
        %p429 = pneg %p222
        %p430 = pneg %p246
        %p431 = pneg %p243
        %p432 = pneg %p267
        %p433 = pneg %p264
        %p434 = pneg %p293
        %p435 = pneg %p290
        %s436 = sand.u32 %s280, 1
        %s437 = scalar_lea.sflag [#allocation4], %s436
        %s438 = sand.u32 %s280, 1
        %s439 = smul.addr %s438, 8
        %s440 = scalar_lea.vmem [#allocation7], %s439
        %v441 = vld [vmem:[%s2] sm:$0xff]
        %v442 = vld [vmem:[%s3] sm:$0xff]
        %v443 = vld [vmem:[%s4] sm:$0xff]
        %v444 = vld [vmem:[%s5] sm:$0xff]
        %v445 = vld [vmem:[%s6] sm:$0xff]
        %v446 = vld [vmem:[%s7] sm:$0xff]
        %v447 = vld [vmem:[%s8] sm:$0xff]
        %v448 = vld [vmem:[%s9] sm:$0xf]
        %v449 = vld [vmem:[%s10] sm:$0xf]
        %v450 = vlaneseq
        %v451 = vand.u32 %v450, 127
        %v452 = vadd.s32 %v451, 128
        %vm453 = vcmp.lt.s32.totalorder %v451, 0
        %v454 = vsub.s32 0, %v451
        %v455 = vsel %vm453, %v454, %v451
        %v456 = vshrl.u32 %v455, 4
        %v457 = vand.u32 %v455, 15
        %v458 = vsub.s32 0, %v457
        %v459 = vsel %vm453, %v458, %v457
        %vm460 = vcmp.lt.s32.totalorder %v452, 0
        %v461 = vsub.s32 0, %v452
        %v462 = vsel %vm460, %v461, %v452
        %v463 = vshrl.u32 %v462, 4
        %v464 = vand.u32 %v462, 15
        %v465 = vsub.s32 0, %v464
        %v466 = vsel %vm460, %v465, %v464
        %vm467 = vcmp.ne.s32.totalorder %v459, 0
        %vm468 = vcmp.ne.s32.totalorder %v466, 0
        %vm469 = vcmp.lt.s32.totalorder %v459, 0
        %vm470 = vcmp.lt.s32.totalorder %v466, 0
        %vm471 = vmand %vm469, %vm467
        %vm472 = vmand %vm470, %vm468
        %v473 = vadd.s32 %v459, 16
        %v474 = vadd.s32 %v466, 16
        %v475 = vsel %vm471, %v473, %v459
        %v476 = vsel %vm472, %v474, %v466
        %vm477 = vcmp.ne.s32.totalorder %v475, 0
        %vm478 = vcmp.ne.s32.totalorder %v476, 0
        %v479 = vsel %vm477, 1, 0
        %v480 = vsel %vm478, 1, 0
        %v481 = vcvt.s32.f32 %v479
        %v482 = vcvt.s32.f32 %v480
        %vm483 = vcmp.ne.s32.totalorder %v475, 15
        %vm484 = vcmp.ne.s32.totalorder %v476, 15
        %v485 = vsel %vm483, 1, 0
        %v486 = vsel %vm484, 1, 0
        %v487 = vcvt.s32.f32 %v485
        %v488 = vcvt.s32.f32 %v486
        %vm489 = vcmp.ge.s32.totalorder %v451, 16
        %vm490 = vcmp.ge.s32.totalorder %v452, 16
        %v491 = vsel %vm489, 1, 0
        %v492 = vsel %vm490, 1, 0
        %v493 = vcvt.s32.f32 %v491
        %v494 = vcvt.s32.f32 %v492
        %vm495 = vcmp.lt.s32.totalorder %v451, 240
        %vm496 = vcmp.lt.s32.totalorder %v452, 240
        %v497 = vsel %vm495, 1, 0
        %v498 = vsel %vm496, 1, 0
        %v499 = vcvt.s32.f32 %v497
        %v500 = vcvt.s32.f32 %v498
        %v501 = vld [vmem:[%s388] sm:$0xff]
        %v502 = vld [vmem:[%s388 + $0x8] sm:$0xff]
        %v503 = vld [vmem:[%s397] sm:$0xff]
        %v504 = vld [vmem:[%s397 + $0x8] sm:$0xff]
        %v505 = vadd.f32 %v501, %v503
        %v506 = vadd.f32 %v502, %v504
        %507 = vrot.lane.b32.xlu0 %v505, 1
        %v508 = vpop.permute.xlu0 %507
        %509 = vrot.lane.b32.xlu0 %v506, 1
        %v510 = vpop.permute.xlu0 %509
        %vm511 = vcmp.lt.s32.totalorder %v451, 1
        %v512 = vsel %vm511, %v508, %v510
        %v513 = vsel %vm511, %v510, %v508
        %v514 = vmul.f32 %v513, %v481
        %v515 = vmul.f32 %v512, %v482
        %516 = vrot.lane.b32.xlu0 %v505, 127
        %v517 = vpop.permute.xlu0 %516
        %518 = vrot.lane.b32.xlu0 %v506, 127
        %v519 = vpop.permute.xlu0 %518
        %vm520 = vcmp.lt.s32.totalorder %v451, 127
        %v521 = vsel %vm520, %v517, %v519
        %v522 = vsel %vm520, %v519, %v517
        %v523 = vmul.f32 %v521, %v487
        %v524 = vmul.f32 %v522, %v488
        %526 = vset.pattern.permute.xlu0 0
        %527 = vperm.xlu0 %526, %v441
        %v528 = vpop.permute.xlu0 %527
        %v530 = vmul.f32 %v514, %v528
        %v531 = vmul.f32 %v515, %v528
        %532 = vset.pattern.permute.xlu0 1
        %533 = vperm.xlu0 %532, %v441
        %v534 = vpop.permute.xlu0 %533
        %v536 = vmul.f32 %v505, %v534
        %v537 = vmul.f32 %v506, %v534
        %v538 = vadd.f32 %v530, %v536
        %v539 = vadd.f32 %v531, %v537
        %540 = vset.pattern.permute.xlu0 2
        %541 = vperm.xlu0 %540, %v441
        %v542 = vpop.permute.xlu0 %541
        %v544 = vmul.f32 %v523, %v542
        %v545 = vmul.f32 %v524, %v542
        %v546 = vadd.f32 %v538, %v544
        %v547 = vadd.f32 %v539, %v545
        %548 = vset.pattern.permute.xlu0 3
        %549 = vperm.xlu0 %548, %v441
        %v550 = vpop.permute.xlu0 %549
        %v552 = vmul.f32 %v514, %v550
        %v553 = vmul.f32 %v515, %v550
        %554 = vset.pattern.permute.xlu0 4
        %555 = vperm.xlu0 %554, %v441
        %v556 = vpop.permute.xlu0 %555
        %v558 = vmul.f32 %v505, %v556
        %v559 = vmul.f32 %v506, %v556
        %v560 = vadd.f32 %v552, %v558
        %v561 = vadd.f32 %v553, %v559
        %562 = vset.pattern.permute.xlu0 5
        %563 = vperm.xlu0 %562, %v441
        %v564 = vpop.permute.xlu0 %563
        %v566 = vmul.f32 %v523, %v564
        %v567 = vmul.f32 %v524, %v564
        %v568 = vadd.f32 %v560, %v566
        %v569 = vadd.f32 %v561, %v567
        %570 = vset.pattern.permute.xlu0 6
        %571 = vperm.xlu0 %570, %v441
        %v572 = vpop.permute.xlu0 %571
        %v574 = vmul.f32 %v514, %v572
        %v575 = vmul.f32 %v515, %v572
        %576 = vset.pattern.permute.xlu0 7
        %577 = vperm.xlu0 %576, %v441
        %v578 = vpop.permute.xlu0 %577
        %v580 = vmul.f32 %v505, %v578
        %v581 = vmul.f32 %v506, %v578
        %v582 = vadd.f32 %v574, %v580
        %v583 = vadd.f32 %v575, %v581
        %584 = vset.pattern.permute.xlu0 8
        %585 = vperm.xlu0 %584, %v441
        %v586 = vpop.permute.xlu0 %585
        %v588 = vmul.f32 %v523, %v586
        %v589 = vmul.f32 %v524, %v586
        %v590 = vadd.f32 %v582, %v588
        %v591 = vadd.f32 %v583, %v589
        %592 = vrot.lane.b32.xlu0 %v546, 16
        %v593 = vpop.permute.xlu0 %592
        %594 = vrot.lane.b32.xlu0 %v547, 16
        %v595 = vpop.permute.xlu0 %594
        %vm596 = vcmp.lt.s32.totalorder %v451, 16
        %v597 = vsel %vm596, %v593, %v595
        %v598 = vsel %vm596, %v595, %v593
        %v599 = vmul.f32 %v598, %v493
        %v600 = vmul.f32 %v597, %v494
        %v601 = vadd.f32 %v568, %v599
        %v602 = vadd.f32 %v569, %v600
        %603 = vrot.lane.b32.xlu0 %v590, 112
        %v604 = vpop.permute.xlu0 %603
        %605 = vrot.lane.b32.xlu0 %v591, 112
        %v606 = vpop.permute.xlu0 %605
        %vm607 = vcmp.lt.s32.totalorder %v451, 112
        %v608 = vsel %vm607, %v604, %v606
        %v609 = vsel %vm607, %v606, %v604
        %v610 = vmul.f32 %v608, %v499
        %v611 = vmul.f32 %v609, %v500
        %v612 = vadd.f32 %v601, %v610
        %v613 = vadd.f32 %v602, %v611
        %615 = vset.pattern.permute.xlu0 0
        %616 = vperm.xlu0 %615, %v443
        %v617 = vpop.permute.xlu0 %616
        %vm619 = vcmask 64512
        %v621 = vsel %vm619, %v442, 0
        %623 = vmatprep.subr.mxu0 %v613
        %624 = vmatpush1.msra.mxu0 %v612
        %625 = vmatprep.subr.mxu0 0.0
        %626 = vmatpush1.msra.mxu0 0.0
        %627 = vmatprep.subr.mxu0 0.0
        %628 = vmatpush1.msra.mxu0 0.0
        %629 = vmatprep.subr.mxu0 0.0
        %630 = vmatpush1.msra.mxu0 0.0
        %631 = vmatprep.subr.mxu0 0.0
        %632 = vmatpush1.msra.mxu0 0.0
        %633 = vmatprep.subr.mxu0 0.0
        %634 = vmatpush1.msra.mxu0 0.0
        %635 = vmatprep.subr.mxu0 0.0
        %636 = vmatpush1.msra.mxu0 0.0
        %637 = vmatprep.subr.mxu0 0.0
        %638 = vmatpush1.msra.mxu0 0.0
        %639 = vmatprep.subr.mxu0 0.0
        %640 = vmatpush1.msra.mxu0 0.0
        %641 = vmatprep.subr.mxu0 0.0
        %642 = vmatpush1.msra.mxu0 0.0
        %643 = vmatprep.subr.mxu0 0.0
        %644 = vmatpush1.msra.mxu0 0.0
        %645 = vmatprep.subr.mxu0 0.0
        %646 = vmatpush1.msra.mxu0 0.0
        %647 = vmatprep.subr.mxu0 0.0
        %648 = vmatpush1.msra.mxu0 0.0
        %649 = vmatprep.subr.mxu0 0.0
        %650 = vmatpush1.msra.mxu0 0.0
        %651 = vmatprep.subr.mxu0 0.0
        %652 = vmatpush1.msra.mxu0 0.0
        %653 = vmatprep.subr.mxu0 0.0
        %654 = vmatpush1.msra.mxu0 0.0
        %655 = vmatprep.subr.mxu0 0.0
        %656 = vmatpush1.msra.mxu0 0.0
        %657 = vmatprep.subr.mxu0 0.0
        %658 = vmatpush1.msra.mxu0 0.0
        %659 = vmatprep.subr.mxu0 0.0
        %660 = vmatpush1.msra.mxu0 0.0
        %661 = vmatprep.subr.mxu0 0.0
        %662 = vmatpush1.msra.mxu0 0.0
        %663 = vmatprep.subr.mxu0 0.0
        %664 = vmatpush1.msra.mxu0 0.0
        %665 = vmatprep.subr.mxu0 0.0
        %666 = vmatpush1.msra.mxu0 0.0
        %667 = vmatprep.subr.mxu0 0.0
        %668 = vmatpush1.msra.mxu0 0.0
        %669 = vmatprep.subr.mxu0 0.0
        %670 = vmatpush1.msra.mxu0 0.0
        %671 = vmatprep.subr.mxu0 0.0
        %672 = vmatpush1.msra.mxu0 0.0
        %673 = vmatprep.subr.mxu0 0.0
        %674 = vmatpush1.msra.mxu0 0.0
        %675 = vmatprep.subr.mxu0 0.0
        %676 = vmatpush1.msra.mxu0 0.0
        %677 = vmatprep.subr.mxu0 0.0
        %678 = vmatpush1.msra.mxu0 0.0
        %679 = vmatprep.subr.mxu0 0.0
        %680 = vmatpush1.msra.mxu0 0.0
        %681 = vmatprep.subr.mxu0 0.0
        %682 = vmatpush1.msra.mxu0 0.0
        %683 = vmatprep.subr.mxu0 0.0
        %684 = vmatpush1.msra.mxu0 0.0
        %685 = vmatprep.subr.mxu0 0.0
        %686 = vmatpush1.msra.mxu0 0.0
        %687 = vmatprep.mubr.f32.mxu0 0.0
        %688 = vmatmul.mubr.f32.gmra.mrb[0].mxu0 %v621
        %v689 = vpop.f32.mrb[0].mxu0
        %v690 = vadd.f32 %v617, %v689
        %v691 = vpop.f32.mrb[0].mxu0
        %v692 = vadd.f32 %v617, %v691
        %693 = vdwg.mxu0
        %v694 = vmax.f32 %v690, 0.0
        %v695 = vmax.f32 %v692, 0.0
        %696 = vrot.lane.b32.xlu0 %v694, 1
        %v697 = vpop.permute.xlu0 %696
        %698 = vrot.lane.b32.xlu0 %v695, 1
        %v699 = vpop.permute.xlu0 %698
        %v700 = vsel %vm511, %v697, %v699
        %v701 = vsel %vm511, %v699, %v697
        %v702 = vmul.f32 %v701, %v481
        %v703 = vmul.f32 %v700, %v482
        %704 = vrot.lane.b32.xlu0 %v694, 127
        %v705 = vpop.permute.xlu0 %704
        %706 = vrot.lane.b32.xlu0 %v695, 127
        %v707 = vpop.permute.xlu0 %706
        %v708 = vsel %vm520, %v705, %v707
        %v709 = vsel %vm520, %v707, %v705
        %v710 = vmul.f32 %v708, %v487
        %v711 = vmul.f32 %v709, %v488
        %713 = vset.pattern.permute.xlu0 0
        %714 = vperm.xlu0 %713, %v444
        %v715 = vpop.permute.xlu0 %714
        %v717 = vmul.f32 %v702, %v715
        %v718 = vmul.f32 %v703, %v715
        %719 = vset.pattern.permute.xlu0 1
        %720 = vperm.xlu0 %719, %v444
        %v721 = vpop.permute.xlu0 %720
        %v723 = vmul.f32 %v694, %v721
        %v724 = vmul.f32 %v695, %v721
        %v725 = vadd.f32 %v717, %v723
        %v726 = vadd.f32 %v718, %v724
        %727 = vset.pattern.permute.xlu0 2
        %728 = vperm.xlu0 %727, %v444
        %v729 = vpop.permute.xlu0 %728
        %v731 = vmul.f32 %v710, %v729
        %v732 = vmul.f32 %v711, %v729
        %v733 = vadd.f32 %v725, %v731
        %v734 = vadd.f32 %v726, %v732
        %735 = vset.pattern.permute.xlu0 3
        %736 = vperm.xlu0 %735, %v444
        %v737 = vpop.permute.xlu0 %736
        %v739 = vmul.f32 %v702, %v737
        %v740 = vmul.f32 %v703, %v737
        %741 = vset.pattern.permute.xlu0 4
        %742 = vperm.xlu0 %741, %v444
        %v743 = vpop.permute.xlu0 %742
        %v745 = vmul.f32 %v694, %v743
        %v746 = vmul.f32 %v695, %v743
        %v747 = vadd.f32 %v739, %v745
        %v748 = vadd.f32 %v740, %v746
        %749 = vset.pattern.permute.xlu0 5
        %750 = vperm.xlu0 %749, %v444
        %v751 = vpop.permute.xlu0 %750
        %v753 = vmul.f32 %v710, %v751
        %v754 = vmul.f32 %v711, %v751
        %v755 = vadd.f32 %v747, %v753
        %v756 = vadd.f32 %v748, %v754
        %757 = vset.pattern.permute.xlu0 6
        %758 = vperm.xlu0 %757, %v444
        %v759 = vpop.permute.xlu0 %758
        %v761 = vmul.f32 %v702, %v759
        %v762 = vmul.f32 %v703, %v759
        %763 = vset.pattern.permute.xlu0 7
        %764 = vperm.xlu0 %763, %v444
        %v765 = vpop.permute.xlu0 %764
        %v767 = vmul.f32 %v694, %v765
        %v768 = vmul.f32 %v695, %v765
        %v769 = vadd.f32 %v761, %v767
        %v770 = vadd.f32 %v762, %v768
        %771 = vset.pattern.permute.xlu0 8
        %772 = vperm.xlu0 %771, %v444
        %v773 = vpop.permute.xlu0 %772
        %v775 = vmul.f32 %v710, %v773
        %v776 = vmul.f32 %v711, %v773
        %v777 = vadd.f32 %v769, %v775
        %v778 = vadd.f32 %v770, %v776
        %779 = vrot.lane.b32.xlu0 %v733, 16
        %v780 = vpop.permute.xlu0 %779
        %781 = vrot.lane.b32.xlu0 %v734, 16
        %v782 = vpop.permute.xlu0 %781
        %v783 = vsel %vm596, %v780, %v782
        %v784 = vsel %vm596, %v782, %v780
        %v785 = vmul.f32 %v784, %v493
        %v786 = vmul.f32 %v783, %v494
        %v787 = vadd.f32 %v755, %v785
        %v788 = vadd.f32 %v756, %v786
        %789 = vrot.lane.b32.xlu0 %v777, 112
        %v790 = vpop.permute.xlu0 %789
        %791 = vrot.lane.b32.xlu0 %v778, 112
        %v792 = vpop.permute.xlu0 %791
        %v793 = vsel %vm607, %v790, %v792
        %v794 = vsel %vm607, %v792, %v790
        %v795 = vmul.f32 %v793, %v499
        %v796 = vmul.f32 %v794, %v500
        %v797 = vadd.f32 %v787, %v795
        %v798 = vadd.f32 %v788, %v796
        %800 = vset.pattern.permute.xlu0 0
        %801 = vperm.xlu0 %800, %v446
        %v802 = vpop.permute.xlu0 %801
        %v805 = vsel %vm619, %v445, 0
        %807 = vmatprep.subr.mxu0 %v798
        %808 = vmatpush1.msra.mxu0 %v797
        %809 = vmatprep.subr.mxu0 0.0
        %810 = vmatpush1.msra.mxu0 0.0
        %811 = vmatprep.subr.mxu0 0.0
        %812 = vmatpush1.msra.mxu0 0.0
        %813 = vmatprep.subr.mxu0 0.0
        %814 = vmatpush1.msra.mxu0 0.0
        %815 = vmatprep.subr.mxu0 0.0
        %816 = vmatpush1.msra.mxu0 0.0
        %817 = vmatprep.subr.mxu0 0.0
        %818 = vmatpush1.msra.mxu0 0.0
        %819 = vmatprep.subr.mxu0 0.0
        %820 = vmatpush1.msra.mxu0 0.0
        %821 = vmatprep.subr.mxu0 0.0
        %822 = vmatpush1.msra.mxu0 0.0
        %823 = vmatprep.subr.mxu0 0.0
        %824 = vmatpush1.msra.mxu0 0.0
        %825 = vmatprep.subr.mxu0 0.0
        %826 = vmatpush1.msra.mxu0 0.0
        %827 = vmatprep.subr.mxu0 0.0
        %828 = vmatpush1.msra.mxu0 0.0
        %829 = vmatprep.subr.mxu0 0.0
        %830 = vmatpush1.msra.mxu0 0.0
        %831 = vmatprep.subr.mxu0 0.0
        %832 = vmatpush1.msra.mxu0 0.0
        %833 = vmatprep.subr.mxu0 0.0
        %834 = vmatpush1.msra.mxu0 0.0
        %835 = vmatprep.subr.mxu0 0.0
        %836 = vmatpush1.msra.mxu0 0.0
        %837 = vmatprep.subr.mxu0 0.0
        %838 = vmatpush1.msra.mxu0 0.0
        %839 = vmatprep.subr.mxu0 0.0
        %840 = vmatpush1.msra.mxu0 0.0
        %841 = vmatprep.subr.mxu0 0.0
        %842 = vmatpush1.msra.mxu0 0.0
        %843 = vmatprep.subr.mxu0 0.0
        %844 = vmatpush1.msra.mxu0 0.0
        %845 = vmatprep.subr.mxu0 0.0
        %846 = vmatpush1.msra.mxu0 0.0
        %847 = vmatprep.subr.mxu0 0.0
        %848 = vmatpush1.msra.mxu0 0.0
        %849 = vmatprep.subr.mxu0 0.0
        %850 = vmatpush1.msra.mxu0 0.0
        %851 = vmatprep.subr.mxu0 0.0
        %852 = vmatpush1.msra.mxu0 0.0
        %853 = vmatprep.subr.mxu0 0.0
        %854 = vmatpush1.msra.mxu0 0.0
        %855 = vmatprep.subr.mxu0 0.0
        %856 = vmatpush1.msra.mxu0 0.0
        %857 = vmatprep.subr.mxu0 0.0
        %858 = vmatpush1.msra.mxu0 0.0
        %859 = vmatprep.subr.mxu0 0.0
        %860 = vmatpush1.msra.mxu0 0.0
        %861 = vmatprep.subr.mxu0 0.0
        %862 = vmatpush1.msra.mxu0 0.0
        %863 = vmatprep.subr.mxu0 0.0
        %864 = vmatpush1.msra.mxu0 0.0
        %865 = vmatprep.subr.mxu0 0.0
        %866 = vmatpush1.msra.mxu0 0.0
        %867 = vmatprep.subr.mxu0 0.0
        %868 = vmatpush1.msra.mxu0 0.0
        %869 = vmatprep.subr.mxu0 0.0
        %870 = vmatpush1.msra.mxu0 0.0
        %871 = vmatprep.mubr.f32.mxu0 0.0
        %872 = vmatmul.mubr.f32.gmra.mrb[0].mxu0 %v805
        %v873 = vpop.f32.mrb[0].mxu0
        %v874 = vadd.f32 %v802, %v873
        %v875 = vpop.f32.mrb[0].mxu0
        %v876 = vadd.f32 %v802, %v875
        %877 = vdwg.mxu0
        %v878 = vmax.f32 %v874, 0.0
        %v879 = vmax.f32 %v876, 0.0
        %880 = vrot.lane.b32.xlu0 %v878, 1
        %v881 = vpop.permute.xlu0 %880
        %882 = vrot.lane.b32.xlu0 %v879, 1
        %v883 = vpop.permute.xlu0 %882
        %v884 = vsel %vm511, %v881, %v883
        %v885 = vsel %vm511, %v883, %v881
        %v886 = vmul.f32 %v885, %v481
        %v887 = vmul.f32 %v884, %v482
        %888 = vrot.lane.b32.xlu0 %v878, 127
        %v889 = vpop.permute.xlu0 %888
        %890 = vrot.lane.b32.xlu0 %v879, 127
        %v891 = vpop.permute.xlu0 %890
        %v892 = vsel %vm520, %v889, %v891
        %v893 = vsel %vm520, %v891, %v889
        %v894 = vmul.f32 %v892, %v487
        %v895 = vmul.f32 %v893, %v488
        %897 = vset.pattern.permute.xlu0 0
        %898 = vperm.xlu0 %897, %v447
        %v899 = vpop.permute.xlu0 %898
        %v901 = vmul.f32 %v886, %v899
        %v902 = vmul.f32 %v887, %v899
        %903 = vset.pattern.permute.xlu0 1
        %904 = vperm.xlu0 %903, %v447
        %v905 = vpop.permute.xlu0 %904
        %v907 = vmul.f32 %v878, %v905
        %v908 = vmul.f32 %v879, %v905
        %v909 = vadd.f32 %v901, %v907
        %v910 = vadd.f32 %v902, %v908
        %911 = vset.pattern.permute.xlu0 2
        %912 = vperm.xlu0 %911, %v447
        %v913 = vpop.permute.xlu0 %912
        %v915 = vmul.f32 %v894, %v913
        %v916 = vmul.f32 %v895, %v913
        %v917 = vadd.f32 %v909, %v915
        %v918 = vadd.f32 %v910, %v916
        %919 = vset.pattern.permute.xlu0 3
        %920 = vperm.xlu0 %919, %v447
        %v921 = vpop.permute.xlu0 %920
        %v923 = vmul.f32 %v886, %v921
        %v924 = vmul.f32 %v887, %v921
        %925 = vset.pattern.permute.xlu0 4
        %926 = vperm.xlu0 %925, %v447
        %v927 = vpop.permute.xlu0 %926
        %v929 = vmul.f32 %v878, %v927
        %v930 = vmul.f32 %v879, %v927
        %v931 = vadd.f32 %v923, %v929
        %v932 = vadd.f32 %v924, %v930
        %933 = vset.pattern.permute.xlu0 5
        %934 = vperm.xlu0 %933, %v447
        %v935 = vpop.permute.xlu0 %934
        %v937 = vmul.f32 %v894, %v935
        %v938 = vmul.f32 %v895, %v935
        %v939 = vadd.f32 %v931, %v937
        %v940 = vadd.f32 %v932, %v938
        %941 = vset.pattern.permute.xlu0 6
        %942 = vperm.xlu0 %941, %v447
        %v943 = vpop.permute.xlu0 %942
        %v945 = vmul.f32 %v886, %v943
        %v946 = vmul.f32 %v887, %v943
        %947 = vset.pattern.permute.xlu0 7
        %948 = vperm.xlu0 %947, %v447
        %v949 = vpop.permute.xlu0 %948
        %v951 = vmul.f32 %v878, %v949
        %v952 = vmul.f32 %v879, %v949
        %v953 = vadd.f32 %v945, %v951
        %v954 = vadd.f32 %v946, %v952
        %955 = vset.pattern.permute.xlu0 8
        %956 = vperm.xlu0 %955, %v447
        %v957 = vpop.permute.xlu0 %956
        %v959 = vmul.f32 %v894, %v957
        %v960 = vmul.f32 %v895, %v957
        %v961 = vadd.f32 %v953, %v959
        %v962 = vadd.f32 %v954, %v960
        %963 = vrot.lane.b32.xlu0 %v917, 16
        %v964 = vpop.permute.xlu0 %963
        %965 = vrot.lane.b32.xlu0 %v918, 16
        %v966 = vpop.permute.xlu0 %965
        %v967 = vsel %vm596, %v964, %v966
        %v968 = vsel %vm596, %v966, %v964
        %v969 = vmul.f32 %v968, %v493
        %v970 = vmul.f32 %v967, %v494
        %v971 = vadd.f32 %v939, %v969
        %v972 = vadd.f32 %v940, %v970
        %973 = vrot.lane.b32.xlu0 %v961, 112
        %v974 = vpop.permute.xlu0 %973
        %975 = vrot.lane.b32.xlu0 %v962, 112
        %v976 = vpop.permute.xlu0 %975
        %v977 = vsel %vm607, %v974, %v976
        %v978 = vsel %vm607, %v976, %v974
        %v979 = vmul.f32 %v977, %v499
        %v980 = vmul.f32 %v978, %v500
        %v981 = vadd.f32 %v971, %v979
        %v982 = vadd.f32 %v972, %v980
        %984 = vset.pattern.permute.xlu0 0
        %985 = vperm.xlu0 %984, %v449
        %v986 = vpop.permute.xlu0 %985
        %v989 = vsel %vm619, %v448, 0
        %991 = vmatprep.subr.mxu0 %v982
        %992 = vmatpush1.msra.mxu0 %v981
        %993 = vmatprep.subr.mxu0 0.0
        %994 = vmatpush1.msra.mxu0 0.0
        %995 = vmatprep.subr.mxu0 0.0
        %996 = vmatpush1.msra.mxu0 0.0
        %997 = vmatprep.subr.mxu0 0.0
        %998 = vmatpush1.msra.mxu0 0.0
        %999 = vmatprep.subr.mxu0 0.0
        %1000 = vmatpush1.msra.mxu0 0.0
        %1001 = vmatprep.subr.mxu0 0.0
        %1002 = vmatpush1.msra.mxu0 0.0
        %1003 = vmatprep.subr.mxu0 0.0
        %1004 = vmatpush1.msra.mxu0 0.0
        %1005 = vmatprep.subr.mxu0 0.0
        %1006 = vmatpush1.msra.mxu0 0.0
        %1007 = vmatprep.subr.mxu0 0.0
        %1008 = vmatpush1.msra.mxu0 0.0
        %1009 = vmatprep.subr.mxu0 0.0
        %1010 = vmatpush1.msra.mxu0 0.0
        %1011 = vmatprep.subr.mxu0 0.0
        %1012 = vmatpush1.msra.mxu0 0.0
        %1013 = vmatprep.subr.mxu0 0.0
        %1014 = vmatpush1.msra.mxu0 0.0
        %1015 = vmatprep.subr.mxu0 0.0
        %1016 = vmatpush1.msra.mxu0 0.0
        %1017 = vmatprep.subr.mxu0 0.0
        %1018 = vmatpush1.msra.mxu0 0.0
        %1019 = vmatprep.subr.mxu0 0.0
        %1020 = vmatpush1.msra.mxu0 0.0
        %1021 = vmatprep.subr.mxu0 0.0
        %1022 = vmatpush1.msra.mxu0 0.0
        %1023 = vmatprep.subr.mxu0 0.0
        %1024 = vmatpush1.msra.mxu0 0.0
        %1025 = vmatprep.subr.mxu0 0.0
        %1026 = vmatpush1.msra.mxu0 0.0
        %1027 = vmatprep.subr.mxu0 0.0
        %1028 = vmatpush1.msra.mxu0 0.0
        %1029 = vmatprep.subr.mxu0 0.0
        %1030 = vmatpush1.msra.mxu0 0.0
        %1031 = vmatprep.subr.mxu0 0.0
        %1032 = vmatpush1.msra.mxu0 0.0
        %1033 = vmatprep.subr.mxu0 0.0
        %1034 = vmatpush1.msra.mxu0 0.0
        %1035 = vmatprep.subr.mxu0 0.0
        %1036 = vmatpush1.msra.mxu0 0.0
        %1037 = vmatprep.subr.mxu0 0.0
        %1038 = vmatpush1.msra.mxu0 0.0
        %1039 = vmatprep.subr.mxu0 0.0
        %1040 = vmatpush1.msra.mxu0 0.0
        %1041 = vmatprep.subr.mxu0 0.0
        %1042 = vmatpush1.msra.mxu0 0.0
        %1043 = vmatprep.subr.mxu0 0.0
        %1044 = vmatpush1.msra.mxu0 0.0
        %1045 = vmatprep.subr.mxu0 0.0
        %1046 = vmatpush1.msra.mxu0 0.0
        %1047 = vmatprep.subr.mxu0 0.0
        %1048 = vmatpush1.msra.mxu0 0.0
        %1049 = vmatprep.subr.mxu0 0.0
        %1050 = vmatpush1.msra.mxu0 0.0
        %1051 = vmatprep.subr.mxu0 0.0
        %1052 = vmatpush1.msra.mxu0 0.0
        %1053 = vmatprep.subr.mxu0 0.0
        %1054 = vmatpush1.msra.mxu0 0.0
        %1055 = vmatprep.mubr.f32.mxu0 0.0
        %1056 = vmatmul.mubr.f32.gmra.mrb[0].mxu0 %v989
        %v1057 = vpop.f32.mrb[0].mxu0
        %v1058 = vadd.f32 %v986, %v1057
        %v1059 = vpop.f32.mrb[0].mxu0
        %v1060 = vadd.f32 %v986, %v1059
        %1061 = vdwg.mxu0
        %v1062 = vmax.f32 %v1058, 0.0
        %v1063 = vmax.f32 %v1060, 0.0
        %v1066 = vcombine.low %v1062, %v1063
        %1068 = vst [vmem:[%s440] sm:$0xff] %v1066
        %s1069 = sand.u32 %s280, 1
        %s1070 = scalar_lea.sflag [#allocation4], %s1069
        %s1071 = sand.u32 %s280, 1
        %s1072 = smul.addr %s1071, 8
        %s1073 = scalar_lea.vmem [#allocation7], %s1072
        // Predicated region
        $region73: #{tpu_custom_call.1} parent=63 // pred_check
          %p1074 = pneg %p290
        $region74: #{tpu_custom_call.1} parent=63 // pred_check_branch
          %1076 = sbr.rel (%p1074) target = $region76
        $region75: #{tpu_custom_call.1} parent=63 // pred_region
          %s1078 = ssub.s32 128, 128
          %1079 = vsyncadd %s1070, %s1078
          %s1080 = smul.addr %s31, 2
          %s1081 = smul.addr %s1080, 64
          %s1082 = scalar_lea.hbm %s11, %s1081
          %s1084 = sshll.u32 %s1073, 4
          %s1085 = int_to_ptr.vmem [resolvable:$true] %s1084
          %1087 = dma.vmem_to_hbm [thread:$0]  %s1085, 128, %s1082, %s1070
        $region76: #{tpu_custom_call.1} parent=63 // pred_fallthru
          _
      $region64: #{tpu_custom_call.1} parent=5 // pred_fallthru
        _
      %p1088 = scmp.le.s32.totalorder 2, %s26
      // Predicated region
      $region77: #{tpu_custom_call.1} parent=5 // pred_check
        %p1089 = pneg %p1088
      $region78: #{tpu_custom_call.1} parent=5 // pred_check_branch
        %1091 = sbr.rel (%p1089) target = $region80
      $region79: #{tpu_custom_call.1} parent=5 // pred_region
        %s1092 = ssub.s32 %s26, 2
        // Predicated region
        $region81: #{tpu_custom_call.1} parent=79 // pred_check
          %p1093 = pneg %p296
        $region82: #{tpu_custom_call.1} parent=79 // pred_check_branch
          %1095 = sbr.rel (%p1093) target = $region84
        $region83: #{tpu_custom_call.1} parent=79 // pred_region
          %s1096 = sand.u32 %s281, 1
          %s1097 = scalar_lea.sflag [#allocation4], %s1096
          %s1098 = sand.u32 %s281, 1
          %s1099 = smul.addr %s1098, 8
          %s1100 = scalar_lea.vmem [#allocation7], %s1099
          %1101 = dma.done %s1097, 128
        $region84: #{tpu_custom_call.1} parent=79 // pred_fallthru
          _
      $region80: #{tpu_custom_call.1} parent=5 // pred_fallthru
        _
    $region6: #{tpu_custom_call.1} parent=1 // loop_footer
      %s30 = sadd.s32 1, %s26
    $region7: #{tpu_custom_call.1} parent=1 // loop_footer_branch
      %25 = sbr.rel target = $region3
    $region8: #{tpu_custom_call.1} parent=1 // loop_exit
      _
    %1102 = vsyncpa [#allocation3], 1
    %s1103 = scalar_lea.sflag [#allocation3], 1
    %1104 = vsyncpa %s1103, 1
    %1105 = vsyncpa [#allocation6], 1
    %s1106 = scalar_lea.sflag [#allocation6], 1
    %1107 = vsyncpa %s1106, 1
    %1108 = vsyncpa [#allocation4], 1
    %s1109 = scalar_lea.sflag [#allocation4], 1
    %1110 = vsyncpa %s1109, 1

</llo_original>
